<compile_context>
chip_gen: v7x
topology: tpu7x:2x2x1
jax: 0.10.0
libtpu: 0.0.40
codegen_flags: <defaults>
</compile_context>

<pallas_src>
import numpy as np
import jax
import jax.numpy as jnp
from jax.experimental import pallas as pl
from jax.experimental.pallas import tpu as pltpu


# ----------------------------- Pallas kernel ------------------------------ #
def _fused_backbone_kernel(cols1_ref, w1_ref, b1_ref, s_ref, w2_ref, b2_ref,
                           f1_ref, f2_ref):
    """conv1 GEMM+bias+ReLU, in-kernel im2col gather, conv2 GEMM+bias+ReLU."""
    # ---- conv1: f32 GEMM (K=27 is tiny; full f32 parity) + f32 bias + ReLU
    acc1 = jnp.dot(w1_ref[...], cols1_ref[...],
                   preferred_element_type=jnp.float32)            # (C1, M1) f32
    f1 = jnp.maximum(acc1 + b1_ref[...], 0.0)
    f1_ref[...] = f1                                              # feature 1 (lane-dense)

    # ---- conv2: im2col of the in-VMEM intermediate via 9 selection matmuls
    f1b = f1.astype(jnp.bfloat16)                                 # (C1, M1) bf16
    n_taps = s_ref.shape[0]
    taps = [jnp.dot(f1b, s_ref[k], preferred_element_type=jnp.float32)
            for k in range(n_taps)]                               # each (C1, M2) f32
    cols2 = jnp.concatenate(taps, axis=0)                         # (taps*C1, M2) f32
    acc2 = jnp.dot(w2_ref[...], cols2,
                   preferred_element_type=jnp.float32)            # (C2, M2) f32
    f2_ref[...] = jnp.maximum(acc2 + b2_ref[...], 0.0)            # feature 2


def _fused_backbone(cols1T, w1m, b1c, s_sel, w2m, b2c):
    """Single-step fused call; all operands/blocks are whole arrays in VMEM."""
    C1, M1 = w1m.shape[0], cols1T.shape[1]
    C2, M2 = w2m.shape[0], s_sel.shape[2]
    return pl.pallas_call(
        _fused_backbone_kernel,
        out_shape=(jax.ShapeDtypeStruct((C1, M1), jnp.float32),
                   jax.ShapeDtypeStruct((C2, M2), jnp.float32)),
        grid_spec=pltpu.PrefetchScalarGridSpec(
            num_scalar_prefetch=0,
            grid=(1,),   # whole problem fits VMEM; one step avoids per-step overhead
            in_specs=[
                pl.BlockSpec(cols1T.shape, lambda i: (0, 0)),
                pl.BlockSpec(w1m.shape, lambda i: (0, 0)),
                pl.BlockSpec(b1c.shape, lambda i: (0, 0)),
                pl.BlockSpec(s_sel.shape, lambda i: (0, 0, 0)),
                pl.BlockSpec(w2m.shape, lambda i: (0, 0)),
                pl.BlockSpec(b2c.shape, lambda i: (0, 0)),
            ],
            out_specs=[
                pl.BlockSpec((C1, M1), lambda i: (0, 0)),
                pl.BlockSpec((C2, M2), lambda i: (0, 0)),
            ],
        ),
        compiler_params=pltpu.CompilerParams(
            dimension_semantics=("arbitrary",)),
    )(cols1T, w1m, b1c, s_sel, w2m, b2c)


# ------------------------------ JAX glue ----------------------------------- #
def _forward_impl(params, s_sel, x_nchw):
    w1m, b1c, w2m, b2c = params
    N, Cin, H, W = x_nchw.shape
    kh = kw = 3

    # conv1 im2col (stride 1, pad 1); stays f32 -> no cast / ones-row / M-pad HLOs.
    x_cnhw = jnp.transpose(x_nchw, (1, 0, 2, 3))                  # (Cin, N, H, W)
    xp = jnp.pad(x_cnhw, ((0, 0), (0, 0), (1, 1), (1, 1)))
    M1 = N * H * W
    taps = [xp[:, :, i:i + H, j:j + W].reshape(Cin, M1)
            for i in range(kh) for j in range(kw)]
    cols1T = jnp.concatenate(taps, axis=0)                        # (kh*kw*Cin, M1)

    f1, f2 = _fused_backbone(cols1T, w1m, b1c, s_sel, w2m, b2c)

    C1, C2 = w1m.shape[0], w2m.shape[0]
    Ho = (H + 2 * 1 - 3) // 2 + 1
    Wo = (W + 2 * 1 - 3) // 2 + 1
    # FeatureExtractor semantics: hooked layer outputs, in order, NCHW (API only).
    return [jnp.transpose(f1.reshape(C1, N, H, W), (1, 0, 2, 3)),
            jnp.transpose(f2.reshape(C2, N, Ho, Wo), (1, 0, 2, 3))]


def _build_gather_matrices(N, H, W, kh, kw, stride, pad):
    """0/1 selection matrices S[k] (M1, M2): cols2T[(i,j),c,:] = f1 @ S[i*kw+j]."""
    Ho = (H + 2 * pad - kh) // stride + 1
    Wo = (W + 2 * pad - kw) // stride + 1
    M1, M2 = N * H * W, N * Ho * Wo
    S = np.zeros((kh * kw, M1, M2), np.float32)
    for i in range(kh):
        for j in range(kw):
            k = i * kw + j
            for n in range(N):
                for ho in range(Ho):
                    sh = ho * stride - pad + i
                    if not (0 <= sh < H):
                        continue
                    for wo in range(Wo):
                        sw = wo * stride - pad + j
                        if 0 <= sw < W:
                            S[k, n * H * W + sh * W + sw,
                              n * Ho * Wo + ho * Wo + wo] = 1.0
    return jnp.asarray(S, jnp.bfloat16)


# ------------------------- Synthetic "BaseModel" --------------------------- #
class BaseModelPallas:
    """Frozen feature extractor; forward returns the list of hooked features (NCHW)."""

    def __init__(self, key):
        k1, k2, k3, k4 = jax.random.split(key, 4)
        # conv1: 3 -> 8, 3x3, stride 1, pad 1
        self.w1 = jax.random.normal(k1, (8, 3, 3, 3), jnp.float32) * 0.1
        self.b1 = jax.random.normal(k2, (8,), jnp.float32) * 0.1
        # conv2: 8 -> 16, 3x3, stride 2, pad 1
        self.w2 = jax.random.normal(k3, (16, 8, 3, 3), jnp.float32) * 0.1
        self.b2 = jax.random.normal(k4, (16,), jnp.float32) * 0.1
        # GEMM-layout weights / column biases prepared once (frozen / eval model).
        w1m = jnp.transpose(self.w1, (0, 2, 3, 1)).reshape(8, 27)
        w2m = jnp.transpose(self.w2, (0, 2, 3, 1)).reshape(16, 72)
        self._params = (w1m, self.b1.reshape(8, 1), w2m, self.b2.reshape(16, 1))
        self._gather_cache = {}
        self._fwd = jax.jit(_forward_impl)

    def _gather_for(self, N, H, W):
        key = (N, H, W)
        if key not in self._gather_cache:
            self._gather_cache[key] = _build_gather_matrices(
                N, H, W, kh=3, kw=3, stride=2, pad=1)
        return self._gather_cache[key]

    def forward(self, x_nchw):
        N, _, H, W = x_nchw.shape
        return self._fwd(self._params, self._gather_for(N, H, W), x_nchw)


# ------------------------------ reference ---------------------------------- #
def _ref_conv_relu(x_nchw, w_oihw, bias, stride, pad):
    y = jax.lax.conv_general_dilated(
        x_nchw, w_oihw, window_strides=(stride, stride),
        padding=((pad, pad), (pad, pad)),
        dimension_numbers=("NCHW", "OIHW", "NCHW"))
    return jnp.maximum(y + bias.reshape(1, -1, 1, 1), 0.0)


if __name__ == "__main__":
    key = jax.random.PRNGKey(0)
    kmodel, kx = jax.random.split(key)
    model = BaseModelPallas(kmodel)

    # input: NCHW, batch=2, channels=3, spatial=16
    x = jax.random.normal(kx, (2, 3, 16, 16), jnp.float32)

    feats = model.forward(x)
    feats = [jax.block_until_ready(f) for f in feats]

    # sanity check vs plain-JAX f32 reference (conv2 activations pass through bf16)
    ref1 = _ref_conv_relu(x, model.w1, model.b1, stride=1, pad=1)
    ref2 = _ref_conv_relu(ref1, model.w2, model.b2, stride=2, pad=1)
    assert feats[0].shape == (2, 8, 16, 16)
    assert feats[1].shape == (2, 16, 8, 8)
    assert jnp.allclose(feats[0], ref1, atol=5e-2, rtol=5e-2)
    assert jnp.allclose(feats[1], ref2, atol=5e-2, rtol=5e-2)

    print("KERNEL_OK")
</pallas_src>

<mosaic_0001>
module attributes {stable_mosaic.version = 11 : i64} {
  func.func @_fused_backbone_kernel(%arg0: i32, %arg1: memref<27x512xf32, #tpu.memory_space<vmem>>, %arg2: memref<8x27xf32, #tpu.memory_space<vmem>>, %arg3: memref<8x1xf32, #tpu.memory_space<vmem>>, %arg4: memref<9x512x128xbf16, #tpu.memory_space<vmem>>, %arg5: memref<16x72xf32, #tpu.memory_space<vmem>>, %arg6: memref<16x1xf32, #tpu.memory_space<vmem>>, %arg7: memref<8x512xf32, #tpu.memory_space<vmem>>, %arg8: memref<16x128xf32, #tpu.memory_space<vmem>>) attributes {dimension_semantics = [#tpu.dimension_semantics<arbitrary>], iteration_bounds = array<i64: 1>, scalar_prefetch = 0 : i64, scratch_operands = 0 : i64, tpu.core_type = #tpu.core_type<tc>, window_params = [{pipeline_mode = #tpu.pipeline_mode<synchronous>, transform_indices = @transform_0, window_bounds = array<i64: 27, 512>}, {pipeline_mode = #tpu.pipeline_mode<synchronous>, transform_indices = @transform_1, window_bounds = array<i64: 8, 27>}, {pipeline_mode = #tpu.pipeline_mode<synchronous>, transform_indices = @transform_2, window_bounds = array<i64: 8, 1>}, {pipeline_mode = #tpu.pipeline_mode<synchronous>, transform_indices = @transform_3, window_bounds = array<i64: 9, 512, 128>}, {pipeline_mode = #tpu.pipeline_mode<synchronous>, transform_indices = @transform_4, window_bounds = array<i64: 16, 72>}, {pipeline_mode = #tpu.pipeline_mode<synchronous>, transform_indices = @transform_5, window_bounds = array<i64: 16, 1>}, {pipeline_mode = #tpu.pipeline_mode<synchronous>, transform_indices = @transform_6, window_bounds = array<i64: 8, 512>}, {pipeline_mode = #tpu.pipeline_mode<synchronous>, transform_indices = @transform_7, window_bounds = array<i64: 16, 128>}]} {
    %c0 = arith.constant 0 : index
    %c0_0 = arith.constant 0 : index
    %0 = vector.load %arg2[%c0, %c0_0] : memref<8x27xf32, #tpu.memory_space<vmem>>, vector<8x27xf32>
    %c0_1 = arith.constant 0 : index
    %c0_2 = arith.constant 0 : index
    %1 = vector.load %arg1[%c0_1, %c0_2] : memref<27x512xf32, #tpu.memory_space<vmem>>, vector<27x512xf32>
    %cst = arith.constant dense<0.000000e+00> : vector<8x512xf32>
    %2 = tpu.matmul %0, %1, %cst {dimension_numbers = #tpu.dot_dimension_numbers<[1], [0], [0], [1], [0, 0, 1, 1], [], []>} : vector<8x27xf32>, vector<27x512xf32>, vector<8x512xf32> -> vector<8x512xf32>
    %c0_3 = arith.constant 0 : index
    %c0_4 = arith.constant 0 : index
    %3 = vector.load %arg3[%c0_3, %c0_4] : memref<8x1xf32, #tpu.memory_space<vmem>>, vector<8x1xf32>
    %4 = vector.broadcast %3 : vector<8x1xf32> to vector<8x512xf32>
    %5 = arith.addf %2, %4 : vector<8x512xf32>
    %cst_5 = arith.constant 0.000000e+00 : f32
    %6 = vector.broadcast %cst_5 : f32 to vector<8x512xf32>
    %7 = arith.maximumf %5, %6 : vector<8x512xf32>
    %c0_6 = arith.constant 0 : index
    %c0_7 = arith.constant 0 : index
    %8 = vector.load %arg7[%c0_6, %c0_7] : memref<8x512xf32, #tpu.memory_space<vmem>>, vector<8x512xf32>
    tpu.vector_store %arg7[%c0_6, %c0_7], %7 {strides = array<i32>} : memref<8x512xf32, #tpu.memory_space<vmem>>, vector<8x512xf32>,
    %9 = arith.truncf %7 : vector<8x512xf32> to vector<8x512xbf16>
    %c0_8 = arith.constant 0 : index
    %c0_9 = arith.constant 0 : index
    %c0_10 = arith.constant 0 : index
    %10 = vector.load %arg4[%c0_8, %c0_9, %c0_10] : memref<9x512x128xbf16, #tpu.memory_space<vmem>>, vector<1x512x128xbf16>
    %11 = vector.shape_cast %10 : vector<1x512x128xbf16> to vector<512x128xbf16>
    %cst_11 = arith.constant dense<0.000000e+00> : vector<8x128xf32>
    %12 = tpu.matmul %9, %11, %cst_11 {dimension_numbers = #tpu.dot_dimension_numbers<[1], [0], [0], [1], [0, 0, 1, 1], [], []>} : vector<8x512xbf16>, vector<512x128xbf16>, vector<8x128xf32> -> vector<8x128xf32>
    %c1 = arith.constant 1 : index
    %c0_12 = arith.constant 0 : index
    %c0_13 = arith.constant 0 : index
    %13 = vector.load %arg4[%c1, %c0_12, %c0_13] : memref<9x512x128xbf16, #tpu.memory_space<vmem>>, vector<1x512x128xbf16>
    %14 = vector.shape_cast %13 : vector<1x512x128xbf16> to vector<512x128xbf16>
    %cst_14 = arith.constant dense<0.000000e+00> : vector<8x128xf32>
    %15 = tpu.matmul %9, %14, %cst_14 {dimension_numbers = #tpu.dot_dimension_numbers<[1], [0], [0], [1], [0, 0, 1, 1], [], []>} : vector<8x512xbf16>, vector<512x128xbf16>, vector<8x128xf32> -> vector<8x128xf32>
    %c2 = arith.constant 2 : index
    %c0_15 = arith.constant 0 : index
    %c0_16 = arith.constant 0 : index
    %16 = vector.load %arg4[%c2, %c0_15, %c0_16] : memref<9x512x128xbf16, #tpu.memory_space<vmem>>, vector<1x512x128xbf16>
    %17 = vector.shape_cast %16 : vector<1x512x128xbf16> to vector<512x128xbf16>
    %cst_17 = arith.constant dense<0.000000e+00> : vector<8x128xf32>
    %18 = tpu.matmul %9, %17, %cst_17 {dimension_numbers = #tpu.dot_dimension_numbers<[1], [0], [0], [1], [0, 0, 1, 1], [], []>} : vector<8x512xbf16>, vector<512x128xbf16>, vector<8x128xf32> -> vector<8x128xf32>
    %c3 = arith.constant 3 : index
    %c0_18 = arith.constant 0 : index
    %c0_19 = arith.constant 0 : index
    %19 = vector.load %arg4[%c3, %c0_18, %c0_19] : memref<9x512x128xbf16, #tpu.memory_space<vmem>>, vector<1x512x128xbf16>
    %20 = vector.shape_cast %19 : vector<1x512x128xbf16> to vector<512x128xbf16>
    %cst_20 = arith.constant dense<0.000000e+00> : vector<8x128xf32>
    %21 = tpu.matmul %9, %20, %cst_20 {dimension_numbers = #tpu.dot_dimension_numbers<[1], [0], [0], [1], [0, 0, 1, 1], [], []>} : vector<8x512xbf16>, vector<512x128xbf16>, vector<8x128xf32> -> vector<8x128xf32>
    %c4 = arith.constant 4 : index
    %c0_21 = arith.constant 0 : index
    %c0_22 = arith.constant 0 : index
    %22 = vector.load %arg4[%c4, %c0_21, %c0_22] : memref<9x512x128xbf16, #tpu.memory_space<vmem>>, vector<1x512x128xbf16>
    %23 = vector.shape_cast %22 : vector<1x512x128xbf16> to vector<512x128xbf16>
    %cst_23 = arith.constant dense<0.000000e+00> : vector<8x128xf32>
    %24 = tpu.matmul %9, %23, %cst_23 {dimension_numbers = #tpu.dot_dimension_numbers<[1], [0], [0], [1], [0, 0, 1, 1], [], []>} : vector<8x512xbf16>, vector<512x128xbf16>, vector<8x128xf32> -> vector<8x128xf32>
    %c5 = arith.constant 5 : index
    %c0_24 = arith.constant 0 : index
    %c0_25 = arith.constant 0 : index
    %25 = vector.load %arg4[%c5, %c0_24, %c0_25] : memref<9x512x128xbf16, #tpu.memory_space<vmem>>, vector<1x512x128xbf16>
    %26 = vector.shape_cast %25 : vector<1x512x128xbf16> to vector<512x128xbf16>
    %cst_26 = arith.constant dense<0.000000e+00> : vector<8x128xf32>
    %27 = tpu.matmul %9, %26, %cst_26 {dimension_numbers = #tpu.dot_dimension_numbers<[1], [0], [0], [1], [0, 0, 1, 1], [], []>} : vector<8x512xbf16>, vector<512x128xbf16>, vector<8x128xf32> -> vector<8x128xf32>
    %c6 = arith.constant 6 : index
    %c0_27 = arith.constant 0 : index
    %c0_28 = arith.constant 0 : index
    %28 = vector.load %arg4[%c6, %c0_27, %c0_28] : memref<9x512x128xbf16, #tpu.memory_space<vmem>>, vector<1x512x128xbf16>
    %29 = vector.shape_cast %28 : vector<1x512x128xbf16> to vector<512x128xbf16>
    %cst_29 = arith.constant dense<0.000000e+00> : vector<8x128xf32>
    %30 = tpu.matmul %9, %29, %cst_29 {dimension_numbers = #tpu.dot_dimension_numbers<[1], [0], [0], [1], [0, 0, 1, 1], [], []>} : vector<8x512xbf16>, vector<512x128xbf16>, vector<8x128xf32> -> vector<8x128xf32>
    %c7 = arith.constant 7 : index
    %c0_30 = arith.constant 0 : index
    %c0_31 = arith.constant 0 : index
    %31 = vector.load %arg4[%c7, %c0_30, %c0_31] : memref<9x512x128xbf16, #tpu.memory_space<vmem>>, vector<1x512x128xbf16>
    %32 = vector.shape_cast %31 : vector<1x512x128xbf16> to vector<512x128xbf16>
    %cst_32 = arith.constant dense<0.000000e+00> : vector<8x128xf32>
    %33 = tpu.matmul %9, %32, %cst_32 {dimension_numbers = #tpu.dot_dimension_numbers<[1], [0], [0], [1], [0, 0, 1, 1], [], []>} : vector<8x512xbf16>, vector<512x128xbf16>, vector<8x128xf32> -> vector<8x128xf32>
    %c8 = arith.constant 8 : index
    %c0_33 = arith.constant 0 : index
    %c0_34 = arith.constant 0 : index
    %34 = vector.load %arg4[%c8, %c0_33, %c0_34] : memref<9x512x128xbf16, #tpu.memory_space<vmem>>, vector<1x512x128xbf16>
    %35 = vector.shape_cast %34 : vector<1x512x128xbf16> to vector<512x128xbf16>
    %cst_35 = arith.constant dense<0.000000e+00> : vector<8x128xf32>
    %36 = tpu.matmul %9, %35, %cst_35 {dimension_numbers = #tpu.dot_dimension_numbers<[1], [0], [0], [1], [0, 0, 1, 1], [], []>} : vector<8x512xbf16>, vector<512x128xbf16>, vector<8x128xf32> -> vector<8x128xf32>
    %37 = tpu.concatenate %12, %15, %18, %21, %24, %27, %30, %33, %36 in 0 : vector<8x128xf32>, vector<8x128xf32>, vector<8x128xf32>, vector<8x128xf32>, vector<8x128xf32>, vector<8x128xf32>, vector<8x128xf32>, vector<8x128xf32>, vector<8x128xf32> -> vector<72x128xf32>
    %c0_36 = arith.constant 0 : index
    %c0_37 = arith.constant 0 : index
    %38 = vector.load %arg5[%c0_36, %c0_37] : memref<16x72xf32, #tpu.memory_space<vmem>>, vector<16x72xf32>
    %cst_38 = arith.constant dense<0.000000e+00> : vector<16x128xf32>
    %39 = tpu.matmul %38, %37, %cst_38 {dimension_numbers = #tpu.dot_dimension_numbers<[1], [0], [0], [1], [0, 0, 1, 1], [], []>} : vector<16x72xf32>, vector<72x128xf32>, vector<16x128xf32> -> vector<16x128xf32>
    %c0_39 = arith.constant 0 : index
    %c0_40 = arith.constant 0 : index
    %40 = vector.load %arg6[%c0_39, %c0_40] : memref<16x1xf32, #tpu.memory_space<vmem>>, vector<16x1xf32>
    %41 = vector.broadcast %40 : vector<16x1xf32> to vector<16x128xf32>
    %42 = arith.addf %39, %41 : vector<16x128xf32>
    %cst_41 = arith.constant 0.000000e+00 : f32
    %43 = vector.broadcast %cst_41 : f32 to vector<16x128xf32>
    %44 = arith.maximumf %42, %43 : vector<16x128xf32>
    %c0_42 = arith.constant 0 : index
    %c0_43 = arith.constant 0 : index
    %45 = vector.load %arg8[%c0_42, %c0_43] : memref<16x128xf32, #tpu.memory_space<vmem>>, vector<16x128xf32>
    tpu.vector_store %arg8[%c0_42, %c0_43], %44 {strides = array<i32>} : memref<16x128xf32, #tpu.memory_space<vmem>>, vector<16x128xf32>,
    return
  }
  func.func @transform_0(%arg0: i32) -> (i32, i32) {
    %c0_i32 = arith.constant 0 : i32
    %c0_i32_0 = arith.constant 0 : i32
    %c0_i32_1 = arith.constant 0 : i32
    return %c0_i32, %c0_i32_0 : i32, i32
  }
  func.func @transform_1(%arg0: i32) -> (i32, i32) {
    %c0_i32 = arith.constant 0 : i32
    %c0_i32_0 = arith.constant 0 : i32
    %c0_i32_1 = arith.constant 0 : i32
    return %c0_i32, %c0_i32_0 : i32, i32
  }
  func.func @transform_2(%arg0: i32) -> (i32, i32) {
    %c0_i32 = arith.constant 0 : i32
    %c0_i32_0 = arith.constant 0 : i32
    %c0_i32_1 = arith.constant 0 : i32
    return %c0_i32, %c0_i32_0 : i32, i32
  }
  func.func @transform_3(%arg0: i32) -> (i32, i32, i32) {
    %c0_i32 = arith.constant 0 : i32
    %c0_i32_0 = arith.constant 0 : i32
    %c0_i32_1 = arith.constant 0 : i32
    %c0_i32_2 = arith.constant 0 : i32
    return %c0_i32, %c0_i32_0, %c0_i32_1 : i32, i32, i32
  }
  func.func @transform_4(%arg0: i32) -> (i32, i32) {
    %c0_i32 = arith.constant 0 : i32
    %c0_i32_0 = arith.constant 0 : i32
    %c0_i32_1 = arith.constant 0 : i32
    return %c0_i32, %c0_i32_0 : i32, i32
  }
  func.func @transform_5(%arg0: i32) -> (i32, i32) {
    %c0_i32 = arith.constant 0 : i32
    %c0_i32_0 = arith.constant 0 : i32
    %c0_i32_1 = arith.constant 0 : i32
    return %c0_i32, %c0_i32_0 : i32, i32
  }
  func.func @transform_6(%arg0: i32) -> (i32, i32) {
    %c0_i32 = arith.constant 0 : i32
    %c0_i32_0 = arith.constant 0 : i32
    %c0_i32_1 = arith.constant 0 : i32
    return %c0_i32, %c0_i32_0 : i32, i32
  }
  func.func @transform_7(%arg0: i32) -> (i32, i32) {
    %c0_i32 = arith.constant 0 : i32
    %c0_i32_0 = arith.constant 0 : i32
    %c0_i32_1 = arith.constant 0 : i32
    return %c0_i32, %c0_i32_0 : i32, i32
  }
}

</mosaic_0001>

<llo_original>
// kernel: _forward_impl.1
$region0: #{_forward_impl.1}
  #allocation0 [shape = 'u32[]', space=smem, size = 0x4, offset = 0x4, fixed_abs, tag = 'smem constant byte address 0x4 - core index']
  #allocation1 [shape = 'u32[144,128]{1,0:T(1,128)}', space=vmem, size = 0x12000, scoped, tag = 'internal scratch']
  %s0 = inlined_call_operand.vmem [shape: f32[27,512], index: 0, kind: input, shape index: {}]
  %s1 = inlined_call_operand.vmem [shape: f32[8,27], index: 1, kind: input, shape index: {}]
  %s2 = inlined_call_operand.vmem [shape: f32[8,1], index: 2, kind: input, shape index: {}]
  %s3 = inlined_call_operand.vmem [shape: bf16[9,512,128], index: 3, kind: input, shape index: {}]
  %s4 = inlined_call_operand.vmem [shape: f32[16,72], index: 4, kind: input, shape index: {}]
  %s5 = inlined_call_operand.vmem [shape: f32[16,1], index: 5, kind: input, shape index: {}]
  %s6 = inlined_call_operand.vmem [shape: f32[8,512], index: 6, kind: output, shape index: {0}]
  %s7 = inlined_call_operand.vmem [shape: f32[16,128], index: 7, kind: output, shape index: {1}]
  %8 = xla_tuple %s6, %s7
  %s9 = sld [smem:[#allocation0]]
  $region42: #{_forward_impl.1} parent=0
    _
  %s11 = ssub.s32 1, %s9
  %s12 = scalar_select 0, %s11, %s9
  // Predicated region
  $region2: #{_forward_impl.1} parent=0 // pred_check
    _
  $region3: #{_forward_impl.1} parent=0 // pred_check_branch
    %14 = sbr.rel (0) target = $region5
  $region4: #{_forward_impl.1} parent=0 // pred_region
    _
  $region5: #{_forward_impl.1} parent=0 // pred_fallthru
    _
  // Predicated region
  $region6: #{_forward_impl.1} parent=0 // pred_check
    _
  $region7: #{_forward_impl.1} parent=0 // pred_check_branch
    %16 = sbr.rel (0) target = $region9
  $region8: #{_forward_impl.1} parent=0 // pred_region
    _
  $region9: #{_forward_impl.1} parent=0 // pred_fallthru
    _
  // Predicated region
  $region10: #{_forward_impl.1} parent=0 // pred_check
    _
  $region11: #{_forward_impl.1} parent=0 // pred_check_branch
    %18 = sbr.rel (0) target = $region13
  $region12: #{_forward_impl.1} parent=0 // pred_region
    _
  $region13: #{_forward_impl.1} parent=0 // pred_fallthru
    _
  // Predicated region
  $region14: #{_forward_impl.1} parent=0 // pred_check
    _
  $region15: #{_forward_impl.1} parent=0 // pred_check_branch
    %20 = sbr.rel (0) target = $region17
  $region16: #{_forward_impl.1} parent=0 // pred_region
    _
  $region17: #{_forward_impl.1} parent=0 // pred_fallthru
    _
  // Predicated region
  $region18: #{_forward_impl.1} parent=0 // pred_check
    _
  $region19: #{_forward_impl.1} parent=0 // pred_check_branch
    %22 = sbr.rel (0) target = $region21
  $region20: #{_forward_impl.1} parent=0 // pred_region
    _
  $region21: #{_forward_impl.1} parent=0 // pred_fallthru
    _
  // Predicated region
  $region22: #{_forward_impl.1} parent=0 // pred_check
    _
  $region23: #{_forward_impl.1} parent=0 // pred_check_branch
    %24 = sbr.rel (0) target = $region25
  $region24: #{_forward_impl.1} parent=0 // pred_region
    _
  $region25: #{_forward_impl.1} parent=0 // pred_fallthru
    _
  %v26 = vld [vmem:[%s1] sm:$0xff]
  %v27 = vld [vmem:[%s0] sm:$0xff]
  %v28 = vld [vmem:[%s0 + $0x8] sm:$0xff]
  %v29 = vld [vmem:[%s0 + $0x10] sm:$0xff]
  %v30 = vld [vmem:[%s0 + $0x18] sm:$0xff]
  %v31 = vld [vmem:[%s0 + $0x20] sm:$0xff]
  %v32 = vld [vmem:[%s0 + $0x28] sm:$0xff]
  %v33 = vld [vmem:[%s0 + $0x30] sm:$0xff]
  %v34 = vld [vmem:[%s0 + $0x38] sm:$0xff]
  %v35 = vld [vmem:[%s0 + $0x40] sm:$0xff]
  %v36 = vld [vmem:[%s0 + $0x48] sm:$0xff]
  %v37 = vld [vmem:[%s0 + $0x50] sm:$0xff]
  %v38 = vld [vmem:[%s0 + $0x58] sm:$0xff]
  %v39 = vld [vmem:[%s0 + $0x60] sm:$0x7]
  %v40 = vld [vmem:[%s0 + $0x68] sm:$0x7]
  %v41 = vld [vmem:[%s0 + $0x70] sm:$0x7]
  %v42 = vld [vmem:[%s0 + $0x78] sm:$0x7]
  %v43 = vld [vmem:[%s2] sm:$0xff]
  %45 = vset.pattern.permute.xlu0 0
  %46 = vperm.xlu0 %45, %v43
  %v47 = vpop.permute.xlu0 %46
  %vm49 = vcmask 220160
  %v51 = vsel %vm49, %v26, 0
  %vm53 = vcmask 1042432
  %v55 = vsel %vm53, %v39, 0
  %v58 = vsel %vm53, %v40, 0
  %v61 = vsel %vm53, %v41, 0
  %v64 = vsel %vm53, %v42, 0
  %66 = vmatprep.subr.mxu0 %v28
  %67 = vmatpush1.msra.mxu0 %v27
  %68 = vmatprep.subr.mxu0 %v32
  %69 = vmatpush1.msra.mxu0 %v31
  %70 = vmatprep.subr.mxu0 %v36
  %71 = vmatpush1.msra.mxu0 %v35
  %72 = vmatprep.subr.mxu0 %v58
  %73 = vmatpush1.msra.mxu0 %v55
  %74 = vmatprep.subr.mxu0 0.0
  %75 = vmatpush1.msra.mxu0 0.0
  %76 = vmatprep.subr.mxu0 0.0
  %77 = vmatpush1.msra.mxu0 0.0
  %78 = vmatprep.subr.mxu0 0.0
  %79 = vmatpush1.msra.mxu0 0.0
  %80 = vmatprep.subr.mxu0 0.0
  %81 = vmatpush1.msra.mxu0 0.0
  %82 = vmatprep.subr.mxu0 0.0
  %83 = vmatpush1.msra.mxu0 0.0
  %84 = vmatprep.subr.mxu0 0.0
  %85 = vmatpush1.msra.mxu0 0.0
  %86 = vmatprep.subr.mxu0 0.0
  %87 = vmatpush1.msra.mxu0 0.0
  %88 = vmatprep.subr.mxu0 0.0
  %89 = vmatpush1.msra.mxu0 0.0
  %90 = vmatprep.subr.mxu0 0.0
  %91 = vmatpush1.msra.mxu0 0.0
  %92 = vmatprep.subr.mxu0 0.0
  %93 = vmatpush1.msra.mxu0 0.0
  %94 = vmatprep.subr.mxu0 0.0
  %95 = vmatpush1.msra.mxu0 0.0
  %96 = vmatprep.subr.mxu0 0.0
  %97 = vmatpush1.msra.mxu0 0.0
  %98 = vmatprep.subr.mxu0 0.0
  %99 = vmatpush1.msra.mxu0 0.0
  %100 = vmatprep.subr.mxu0 0.0
  %101 = vmatpush1.msra.mxu0 0.0
  %102 = vmatprep.subr.mxu0 0.0
  %103 = vmatpush1.msra.mxu0 0.0
  %104 = vmatprep.subr.mxu0 0.0
  %105 = vmatpush1.msra.mxu0 0.0
  %106 = vmatprep.subr.mxu0 0.0
  %107 = vmatpush1.msra.mxu0 0.0
  %108 = vmatprep.subr.mxu0 0.0
  %109 = vmatpush1.msra.mxu0 0.0
  %110 = vmatprep.subr.mxu0 0.0
  %111 = vmatpush1.msra.mxu0 0.0
  %112 = vmatprep.subr.mxu0 0.0
  %113 = vmatpush1.msra.mxu0 0.0
  %114 = vmatprep.subr.mxu0 0.0
  %115 = vmatpush1.msra.mxu0 0.0
  %116 = vmatprep.subr.mxu0 0.0
  %117 = vmatpush1.msra.mxu0 0.0
  %118 = vmatprep.subr.mxu0 0.0
  %119 = vmatpush1.msra.mxu0 0.0
  %120 = vmatprep.subr.mxu0 0.0
  %121 = vmatpush1.msra.mxu0 0.0
  %122 = vmatprep.subr.mxu0 0.0
  %123 = vmatpush1.msra.mxu0 0.0
  %124 = vmatprep.subr.mxu0 0.0
  %125 = vmatpush1.msra.mxu0 0.0
  %126 = vmatprep.subr.mxu0 0.0
  %127 = vmatpush1.msra.mxu0 0.0
  %128 = vmatprep.subr.mxu0 0.0
  %129 = vmatpush1.msra.mxu0 0.0
  %130 = vmatprep.mubr.f32.mxu0 0.0
  %131 = vmatmul.mubr.f32.gmra.mrb[0].mxu0 %v51
  %v132 = vpop.f32.mrb[0].mxu0
  %v133 = vadd.f32 %v47, %v132
  %v134 = vpop.f32.mrb[0].mxu0
  %v135 = vadd.f32 %v47, %v134
  %136 = vdwg.mxu0
  %137 = vmatprep.subr.mxu0 %v30
  %138 = vmatpush1.msra.mxu0 %v29
  %139 = vmatprep.subr.mxu0 %v34
  %140 = vmatpush1.msra.mxu0 %v33
  %141 = vmatprep.subr.mxu0 %v38
  %142 = vmatpush1.msra.mxu0 %v37
  %143 = vmatprep.subr.mxu0 %v64
  %144 = vmatpush1.msra.mxu0 %v61
  %145 = vmatprep.subr.mxu0 0.0
  %146 = vmatpush1.msra.mxu0 0.0
  %147 = vmatprep.subr.mxu0 0.0
  %148 = vmatpush1.msra.mxu0 0.0
  %149 = vmatprep.subr.mxu0 0.0
  %150 = vmatpush1.msra.mxu0 0.0
  %151 = vmatprep.subr.mxu0 0.0
  %152 = vmatpush1.msra.mxu0 0.0
  %153 = vmatprep.subr.mxu0 0.0
  %154 = vmatpush1.msra.mxu0 0.0
  %155 = vmatprep.subr.mxu0 0.0
  %156 = vmatpush1.msra.mxu0 0.0
  %157 = vmatprep.subr.mxu0 0.0
  %158 = vmatpush1.msra.mxu0 0.0
  %159 = vmatprep.subr.mxu0 0.0
  %160 = vmatpush1.msra.mxu0 0.0
  %161 = vmatprep.subr.mxu0 0.0
  %162 = vmatpush1.msra.mxu0 0.0
  %163 = vmatprep.subr.mxu0 0.0
  %164 = vmatpush1.msra.mxu0 0.0
  %165 = vmatprep.subr.mxu0 0.0
  %166 = vmatpush1.msra.mxu0 0.0
  %167 = vmatprep.subr.mxu0 0.0
  %168 = vmatpush1.msra.mxu0 0.0
  %169 = vmatprep.subr.mxu0 0.0
  %170 = vmatpush1.msra.mxu0 0.0
  %171 = vmatprep.subr.mxu0 0.0
  %172 = vmatpush1.msra.mxu0 0.0
  %173 = vmatprep.subr.mxu0 0.0
  %174 = vmatpush1.msra.mxu0 0.0
  %175 = vmatprep.subr.mxu0 0.0
  %176 = vmatpush1.msra.mxu0 0.0
  %177 = vmatprep.subr.mxu0 0.0
  %178 = vmatpush1.msra.mxu0 0.0
  %179 = vmatprep.subr.mxu0 0.0
  %180 = vmatpush1.msra.mxu0 0.0
  %181 = vmatprep.subr.mxu0 0.0
  %182 = vmatpush1.msra.mxu0 0.0
  %183 = vmatprep.subr.mxu0 0.0
  %184 = vmatpush1.msra.mxu0 0.0
  %185 = vmatprep.subr.mxu0 0.0
  %186 = vmatpush1.msra.mxu0 0.0
  %187 = vmatprep.subr.mxu0 0.0
  %188 = vmatpush1.msra.mxu0 0.0
  %189 = vmatprep.subr.mxu0 0.0
  %190 = vmatpush1.msra.mxu0 0.0
  %191 = vmatprep.subr.mxu0 0.0
  %192 = vmatpush1.msra.mxu0 0.0
  %193 = vmatprep.subr.mxu0 0.0
  %194 = vmatpush1.msra.mxu0 0.0
  %195 = vmatprep.subr.mxu0 0.0
  %196 = vmatpush1.msra.mxu0 0.0
  %197 = vmatprep.subr.mxu0 0.0
  %198 = vmatpush1.msra.mxu0 0.0
  %199 = vmatprep.subr.mxu0 0.0
  %200 = vmatpush1.msra.mxu0 0.0
  %201 = vmatprep.mubr.f32.mxu0 0.0
  %202 = vmatmul.mubr.f32.gmra.mrb[0].mxu0 %v51
  %v203 = vpop.f32.mrb[0].mxu0
  %v204 = vadd.f32 %v47, %v203
  %v205 = vpop.f32.mrb[0].mxu0
  %v206 = vadd.f32 %v47, %v205
  %207 = vdwg.mxu0
  %v208 = vmax.f32 %v133, 0.0
  %v209 = vmax.f32 %v135, 0.0
  %v210 = vmax.f32 %v204, 0.0
  %v211 = vmax.f32 %v206, 0.0
  %212 = vst [vmem:[%s6] sm:$0xff] %v208
  %213 = vst [vmem:[%s6 + $0x8] sm:$0xff] %v209
  %214 = vst [vmem:[%s6 + $0x10] sm:$0xff] %v210
  %215 = vst [vmem:[%s6 + $0x18] sm:$0xff] %v211
  %v216 = vpack.c.bf16 %v208, %v208
  %v217 = vpack.c.bf16 %v209, %v209
  %v218 = vpack.c.bf16 %v210, %v210
  %v219 = vpack.c.bf16 %v211, %v211
  %v220 = vld [vmem:[%s3] sm:$0xf]
  %v221 = vld [vmem:[%s3 + $0x4] sm:$0xf]
  %v222 = vld [vmem:[%s3 + $0x8] sm:$0xf]
  %v223 = vld [vmem:[%s3 + $0xc] sm:$0xf]
  %v224 = vld [vmem:[%s3 + $0x10] sm:$0xf]
  %v225 = vld [vmem:[%s3 + $0x14] sm:$0xf]
  %v226 = vld [vmem:[%s3 + $0x18] sm:$0xf]
  %v227 = vld [vmem:[%s3 + $0x1c] sm:$0xf]
  %v228 = vld [vmem:[%s3 + $0x20] sm:$0xf]
  %v229 = vld [vmem:[%s3 + $0x24] sm:$0xf]
  %v230 = vld [vmem:[%s3 + $0x28] sm:$0xf]
  %v231 = vld [vmem:[%s3 + $0x2c] sm:$0xf]
  %v232 = vld [vmem:[%s3 + $0x30] sm:$0xf]
  %v233 = vld [vmem:[%s3 + $0x34] sm:$0xf]
  %v234 = vld [vmem:[%s3 + $0x38] sm:$0xf]
  %v235 = vld [vmem:[%s3 + $0x3c] sm:$0xf]
  %v236 = vld [vmem:[%s3 + $0x40] sm:$0xf]
  %v237 = vld [vmem:[%s3 + $0x44] sm:$0xf]
  %v238 = vld [vmem:[%s3 + $0x48] sm:$0xf]
  %v239 = vld [vmem:[%s3 + $0x4c] sm:$0xf]
  %v240 = vld [vmem:[%s3 + $0x50] sm:$0xf]
  %v241 = vld [vmem:[%s3 + $0x54] sm:$0xf]
  %v242 = vld [vmem:[%s3 + $0x58] sm:$0xf]
  %v243 = vld [vmem:[%s3 + $0x5c] sm:$0xf]
  %v244 = vld [vmem:[%s3 + $0x60] sm:$0xf]
  %v245 = vld [vmem:[%s3 + $0x64] sm:$0xf]
  %v246 = vld [vmem:[%s3 + $0x68] sm:$0xf]
  %v247 = vld [vmem:[%s3 + $0x6c] sm:$0xf]
  %v248 = vld [vmem:[%s3 + $0x70] sm:$0xf]
  %v249 = vld [vmem:[%s3 + $0x74] sm:$0xf]
  %v250 = vld [vmem:[%s3 + $0x78] sm:$0xf]
  %v251 = vld [vmem:[%s3 + $0x7c] sm:$0xf]
  %v252 = vld [vmem:[%s3 + $0x80] sm:$0xf]
  %v253 = vld [vmem:[%s3 + $0x84] sm:$0xf]
  %v254 = vld [vmem:[%s3 + $0x88] sm:$0xf]
  %v255 = vld [vmem:[%s3 + $0x8c] sm:$0xf]
  %v256 = vld [vmem:[%s3 + $0x90] sm:$0xf]
  %v257 = vld [vmem:[%s3 + $0x94] sm:$0xf]
  %v258 = vld [vmem:[%s3 + $0x98] sm:$0xf]
  %v259 = vld [vmem:[%s3 + $0x9c] sm:$0xf]
  %v260 = vld [vmem:[%s3 + $0xa0] sm:$0xf]
  %v261 = vld [vmem:[%s3 + $0xa4] sm:$0xf]
  %v262 = vld [vmem:[%s3 + $0xa8] sm:$0xf]
  %v263 = vld [vmem:[%s3 + $0xac] sm:$0xf]
  %v264 = vld [vmem:[%s3 + $0xb0] sm:$0xf]
  %v265 = vld [vmem:[%s3 + $0xb4] sm:$0xf]
  %v266 = vld [vmem:[%s3 + $0xb8] sm:$0xf]
  %v267 = vld [vmem:[%s3 + $0xbc] sm:$0xf]
  %v268 = vld [vmem:[%s3 + $0xc0] sm:$0xf]
  %v269 = vld [vmem:[%s3 + $0xc4] sm:$0xf]
  %v270 = vld [vmem:[%s3 + $0xc8] sm:$0xf]
  %v271 = vld [vmem:[%s3 + $0xcc] sm:$0xf]
  %v272 = vld [vmem:[%s3 + $0xd0] sm:$0xf]
  %v273 = vld [vmem:[%s3 + $0xd4] sm:$0xf]
  %v274 = vld [vmem:[%s3 + $0xd8] sm:$0xf]
  %v275 = vld [vmem:[%s3 + $0xdc] sm:$0xf]
  %v276 = vld [vmem:[%s3 + $0xe0] sm:$0xf]
  %v277 = vld [vmem:[%s3 + $0xe4] sm:$0xf]
  %v278 = vld [vmem:[%s3 + $0xe8] sm:$0xf]
  %v279 = vld [vmem:[%s3 + $0xec] sm:$0xf]
  %v280 = vld [vmem:[%s3 + $0xf0] sm:$0xf]
  %v281 = vld [vmem:[%s3 + $0xf4] sm:$0xf]
  %v282 = vld [vmem:[%s3 + $0xf8] sm:$0xf]
  %v283 = vld [vmem:[%s3 + $0xfc] sm:$0xf]
  %v348 = vunpack.c.l.b16 %v220
  %v349 = vunpack.c.l.b16 %v221
  %v350 = vunpack.c.l.b16 %v222
  %v351 = vunpack.c.l.b16 %v223
  %v352 = vunpack.c.l.b16 %v224
  %v353 = vunpack.c.l.b16 %v225
  %v354 = vunpack.c.l.b16 %v226
  %v355 = vunpack.c.l.b16 %v227
  %v356 = vunpack.c.l.b16 %v228
  %v357 = vunpack.c.l.b16 %v229
  %v358 = vunpack.c.l.b16 %v230
  %v359 = vunpack.c.l.b16 %v231
  %v360 = vunpack.c.l.b16 %v232
  %v361 = vunpack.c.l.b16 %v233
  %v362 = vunpack.c.l.b16 %v234
  %v363 = vunpack.c.l.b16 %v235
  %v364 = vunpack.c.l.b16 %v236
  %v365 = vunpack.c.l.b16 %v237
  %v366 = vunpack.c.l.b16 %v238
  %v367 = vunpack.c.l.b16 %v239
  %v368 = vunpack.c.l.b16 %v240
  %v369 = vunpack.c.l.b16 %v241
  %v370 = vunpack.c.l.b16 %v242
  %v371 = vunpack.c.l.b16 %v243
  %v372 = vunpack.c.l.b16 %v244
  %v373 = vunpack.c.l.b16 %v245
  %v374 = vunpack.c.l.b16 %v246
  %v375 = vunpack.c.l.b16 %v247
  %v376 = vunpack.c.l.b16 %v248
  %v377 = vunpack.c.l.b16 %v249
  %v378 = vunpack.c.l.b16 %v250
  %v379 = vunpack.c.l.b16 %v251
  %v380 = vunpack.c.l.b16 %v252
  %v381 = vunpack.c.l.b16 %v253
  %v382 = vunpack.c.l.b16 %v254
  %v383 = vunpack.c.l.b16 %v255
  %v384 = vunpack.c.l.b16 %v256
  %v385 = vunpack.c.l.b16 %v257
  %v386 = vunpack.c.l.b16 %v258
  %v387 = vunpack.c.l.b16 %v259
  %v388 = vunpack.c.l.b16 %v260
  %v389 = vunpack.c.l.b16 %v261
  %v390 = vunpack.c.l.b16 %v262
  %v391 = vunpack.c.l.b16 %v263
  %v392 = vunpack.c.l.b16 %v264
  %v393 = vunpack.c.l.b16 %v265
  %v394 = vunpack.c.l.b16 %v266
  %v395 = vunpack.c.l.b16 %v267
  %v396 = vunpack.c.l.b16 %v268
  %v397 = vunpack.c.l.b16 %v269
  %v398 = vunpack.c.l.b16 %v270
  %v399 = vunpack.c.l.b16 %v271
  %v400 = vunpack.c.l.b16 %v272
  %v401 = vunpack.c.l.b16 %v273
  %v402 = vunpack.c.l.b16 %v274
  %v403 = vunpack.c.l.b16 %v275
  %v404 = vunpack.c.l.b16 %v276
  %v405 = vunpack.c.l.b16 %v277
  %v406 = vunpack.c.l.b16 %v278
  %v407 = vunpack.c.l.b16 %v279
  %v408 = vunpack.c.l.b16 %v280
  %v409 = vunpack.c.l.b16 %v281
  %v410 = vunpack.c.l.b16 %v282
  %v411 = vunpack.c.l.b16 %v283
  %v412 = vpack.c.b16 %v349, %v348
  %v413 = vpack.c.b16 %v351, %v350
  %v414 = vpack.c.b16 %v353, %v352
  %v415 = vpack.c.b16 %v355, %v354
  %v416 = vpack.c.b16 %v357, %v356
  %v417 = vpack.c.b16 %v359, %v358
  %v418 = vpack.c.b16 %v361, %v360
  %v419 = vpack.c.b16 %v363, %v362
  %v420 = vpack.c.b16 %v365, %v364
  %v421 = vpack.c.b16 %v367, %v366
  %v422 = vpack.c.b16 %v369, %v368
  %v423 = vpack.c.b16 %v371, %v370
  %v424 = vpack.c.b16 %v373, %v372
  %v425 = vpack.c.b16 %v375, %v374
  %v426 = vpack.c.b16 %v377, %v376
  %v427 = vpack.c.b16 %v379, %v378
  %v428 = vpack.c.b16 %v381, %v380
  %v429 = vpack.c.b16 %v383, %v382
  %v430 = vpack.c.b16 %v385, %v384
  %v431 = vpack.c.b16 %v387, %v386
  %v432 = vpack.c.b16 %v389, %v388
  %v433 = vpack.c.b16 %v391, %v390
  %v434 = vpack.c.b16 %v393, %v392
  %v435 = vpack.c.b16 %v395, %v394
  %v436 = vpack.c.b16 %v397, %v396
  %v437 = vpack.c.b16 %v399, %v398
  %v438 = vpack.c.b16 %v401, %v400
  %v439 = vpack.c.b16 %v403, %v402
  %v440 = vpack.c.b16 %v405, %v404
  %v441 = vpack.c.b16 %v407, %v406
  %v442 = vpack.c.b16 %v409, %v408
  %v443 = vpack.c.b16 %v411, %v410
  %476 = vmatprep.subr.bf16.mxu0 0
  %477 = vmatpush1.bf16.msra.mxu0 %v412
  %478 = vmatprep.subr.bf16.mxu0 0
  %479 = vmatpush1.bf16.msra.mxu0 %v413
  %480 = vmatprep.subr.bf16.mxu0 0
  %481 = vmatpush1.bf16.msra.mxu0 %v414
  %482 = vmatprep.subr.bf16.mxu0 0
  %483 = vmatpush1.bf16.msra.mxu0 %v415
  %484 = vmatprep.subr.bf16.mxu0 0
  %485 = vmatpush1.bf16.msra.mxu0 %v416
  %486 = vmatprep.subr.bf16.mxu0 0
  %487 = vmatpush1.bf16.msra.mxu0 %v417
  %488 = vmatprep.subr.bf16.mxu0 0
  %489 = vmatpush1.bf16.msra.mxu0 %v418
  %490 = vmatprep.subr.bf16.mxu0 0
  %491 = vmatpush1.bf16.msra.mxu0 %v419
  %492 = vmatprep.subr.bf16.mxu0 0
  %493 = vmatpush1.bf16.msra.mxu0 %v420
  %494 = vmatprep.subr.bf16.mxu0 0
  %495 = vmatpush1.bf16.msra.mxu0 %v421
  %496 = vmatprep.subr.bf16.mxu0 0
  %497 = vmatpush1.bf16.msra.mxu0 %v422
  %498 = vmatprep.subr.bf16.mxu0 0
  %499 = vmatpush1.bf16.msra.mxu0 %v423
  %500 = vmatprep.subr.bf16.mxu0 0
  %501 = vmatpush1.bf16.msra.mxu0 %v424
  %502 = vmatprep.subr.bf16.mxu0 0
  %503 = vmatpush1.bf16.msra.mxu0 %v425
  %504 = vmatprep.subr.bf16.mxu0 0
  %505 = vmatpush1.bf16.msra.mxu0 %v426
  %506 = vmatprep.subr.bf16.mxu0 0
  %507 = vmatpush1.bf16.msra.mxu0 %v427
  %508 = vmatprep.mubr.bf16.mxu0 %v217
  %509 = vmatmul.mubr.bf16.gmra.mrb[0].mxu0 %v216
  %v510 = vpop.f32.mrb[0].mxu0
  %v511 = vadd.f32 0.0, %v510
  %v512 = vpop.f32.mrb[0].mxu0
  %v513 = vpop.f32.mrb[0].mxu0
  %v514 = vpop.f32.mrb[0].mxu0
  %515 = vdwg.mxu0
  %516 = vmatprep.subr.bf16.mxu0 0
  %517 = vmatpush1.bf16.msra.mxu0 %v428
  %518 = vmatprep.subr.bf16.mxu0 0
  %519 = vmatpush1.bf16.msra.mxu0 %v429
  %520 = vmatprep.subr.bf16.mxu0 0
  %521 = vmatpush1.bf16.msra.mxu0 %v430
  %522 = vmatprep.subr.bf16.mxu0 0
  %523 = vmatpush1.bf16.msra.mxu0 %v431
  %524 = vmatprep.subr.bf16.mxu0 0
  %525 = vmatpush1.bf16.msra.mxu0 %v432
  %526 = vmatprep.subr.bf16.mxu0 0
  %527 = vmatpush1.bf16.msra.mxu0 %v433
  %528 = vmatprep.subr.bf16.mxu0 0
  %529 = vmatpush1.bf16.msra.mxu0 %v434
  %530 = vmatprep.subr.bf16.mxu0 0
  %531 = vmatpush1.bf16.msra.mxu0 %v435
  %532 = vmatprep.subr.bf16.mxu0 0
  %533 = vmatpush1.bf16.msra.mxu0 %v436
  %534 = vmatprep.subr.bf16.mxu0 0
  %535 = vmatpush1.bf16.msra.mxu0 %v437
  %536 = vmatprep.subr.bf16.mxu0 0
  %537 = vmatpush1.bf16.msra.mxu0 %v438
  %538 = vmatprep.subr.bf16.mxu0 0
  %539 = vmatpush1.bf16.msra.mxu0 %v439
  %540 = vmatprep.subr.bf16.mxu0 0
  %541 = vmatpush1.bf16.msra.mxu0 %v440
  %542 = vmatprep.subr.bf16.mxu0 0
  %543 = vmatpush1.bf16.msra.mxu0 %v441
  %544 = vmatprep.subr.bf16.mxu0 0
  %545 = vmatpush1.bf16.msra.mxu0 %v442
  %546 = vmatprep.subr.bf16.mxu0 0
  %547 = vmatpush1.bf16.msra.mxu0 %v443
  %548 = vmatprep.mubr.bf16.mxu0 %v219
  %549 = vmatmul.mubr.bf16.gmra.mrb[0].mxu0 %v218
  %v550 = vpop.f32.mrb[0].mxu0
  %v551 = vadd.f32 %v511, %v550
  %v552 = vpop.f32.mrb[0].mxu0
  %v553 = vpop.f32.mrb[0].mxu0
  %v554 = vpop.f32.mrb[0].mxu0
  %555 = vdwg.mxu0
  %s556 = scalar_lea.vmem %s3, 256
  %v557 = vld [vmem:[%s556] sm:$0xf]
  %v558 = vld [vmem:[%s556 + $0x4] sm:$0xf]
  %v559 = vld [vmem:[%s556 + $0x8] sm:$0xf]
  %v560 = vld [vmem:[%s556 + $0xc] sm:$0xf]
  %v561 = vld [vmem:[%s556 + $0x10] sm:$0xf]
  %v562 = vld [vmem:[%s556 + $0x14] sm:$0xf]
  %v563 = vld [vmem:[%s556 + $0x18] sm:$0xf]
  %v564 = vld [vmem:[%s556 + $0x1c] sm:$0xf]
  %v565 = vld [vmem:[%s556 + $0x20] sm:$0xf]
  %v566 = vld [vmem:[%s556 + $0x24] sm:$0xf]
  %v567 = vld [vmem:[%s556 + $0x28] sm:$0xf]
  %v568 = vld [vmem:[%s556 + $0x2c] sm:$0xf]
  %v569 = vld [vmem:[%s556 + $0x30] sm:$0xf]
  %v570 = vld [vmem:[%s556 + $0x34] sm:$0xf]
  %v571 = vld [vmem:[%s556 + $0x38] sm:$0xf]
  %v572 = vld [vmem:[%s556 + $0x3c] sm:$0xf]
  %v573 = vld [vmem:[%s556 + $0x40] sm:$0xf]
  %v574 = vld [vmem:[%s556 + $0x44] sm:$0xf]
  %v575 = vld [vmem:[%s556 + $0x48] sm:$0xf]
  %v576 = vld [vmem:[%s556 + $0x4c] sm:$0xf]
  %v577 = vld [vmem:[%s556 + $0x50] sm:$0xf]
  %v578 = vld [vmem:[%s556 + $0x54] sm:$0xf]
  %v579 = vld [vmem:[%s556 + $0x58] sm:$0xf]
  %v580 = vld [vmem:[%s556 + $0x5c] sm:$0xf]
  %v581 = vld [vmem:[%s556 + $0x60] sm:$0xf]
  %v582 = vld [vmem:[%s556 + $0x64] sm:$0xf]
  %v583 = vld [vmem:[%s556 + $0x68] sm:$0xf]
  %v584 = vld [vmem:[%s556 + $0x6c] sm:$0xf]
  %v585 = vld [vmem:[%s556 + $0x70] sm:$0xf]
  %v586 = vld [vmem:[%s556 + $0x74] sm:$0xf]
  %v587 = vld [vmem:[%s556 + $0x78] sm:$0xf]
  %v588 = vld [vmem:[%s556 + $0x7c] sm:$0xf]
  %v589 = vld [vmem:[%s556 + $0x80] sm:$0xf]
  %v590 = vld [vmem:[%s556 + $0x84] sm:$0xf]
  %v591 = vld [vmem:[%s556 + $0x88] sm:$0xf]
  %v592 = vld [vmem:[%s556 + $0x8c] sm:$0xf]
  %v593 = vld [vmem:[%s556 + $0x90] sm:$0xf]
  %v594 = vld [vmem:[%s556 + $0x94] sm:$0xf]
  %v595 = vld [vmem:[%s556 + $0x98] sm:$0xf]
  %v596 = vld [vmem:[%s556 + $0x9c] sm:$0xf]
  %v597 = vld [vmem:[%s556 + $0xa0] sm:$0xf]
  %v598 = vld [vmem:[%s556 + $0xa4] sm:$0xf]
  %v599 = vld [vmem:[%s556 + $0xa8] sm:$0xf]
  %v600 = vld [vmem:[%s556 + $0xac] sm:$0xf]
  %v601 = vld [vmem:[%s556 + $0xb0] sm:$0xf]
  %v602 = vld [vmem:[%s556 + $0xb4] sm:$0xf]
  %v603 = vld [vmem:[%s556 + $0xb8] sm:$0xf]
  %v604 = vld [vmem:[%s556 + $0xbc] sm:$0xf]
  %v605 = vld [vmem:[%s556 + $0xc0] sm:$0xf]
  %v606 = vld [vmem:[%s556 + $0xc4] sm:$0xf]
  %v607 = vld [vmem:[%s556 + $0xc8] sm:$0xf]
  %v608 = vld [vmem:[%s556 + $0xcc] sm:$0xf]
  %v609 = vld [vmem:[%s556 + $0xd0] sm:$0xf]
  %v610 = vld [vmem:[%s556 + $0xd4] sm:$0xf]
  %v611 = vld [vmem:[%s556 + $0xd8] sm:$0xf]
  %v612 = vld [vmem:[%s556 + $0xdc] sm:$0xf]
  %v613 = vld [vmem:[%s556 + $0xe0] sm:$0xf]
  %v614 = vld [vmem:[%s556 + $0xe4] sm:$0xf]
  %v615 = vld [vmem:[%s556 + $0xe8] sm:$0xf]
  %v616 = vld [vmem:[%s556 + $0xec] sm:$0xf]
  %v617 = vld [vmem:[%s556 + $0xf0] sm:$0xf]
  %v618 = vld [vmem:[%s556 + $0xf4] sm:$0xf]
  %v619 = vld [vmem:[%s556 + $0xf8] sm:$0xf]
  %v620 = vld [vmem:[%s556 + $0xfc] sm:$0xf]
  %v685 = vunpack.c.l.b16 %v557
  %v686 = vunpack.c.l.b16 %v558
  %v687 = vunpack.c.l.b16 %v559
  %v688 = vunpack.c.l.b16 %v560
  %v689 = vunpack.c.l.b16 %v561
  %v690 = vunpack.c.l.b16 %v562
  %v691 = vunpack.c.l.b16 %v563
  %v692 = vunpack.c.l.b16 %v564
  %v693 = vunpack.c.l.b16 %v565
  %v694 = vunpack.c.l.b16 %v566
  %v695 = vunpack.c.l.b16 %v567
  %v696 = vunpack.c.l.b16 %v568
  %v697 = vunpack.c.l.b16 %v569
  %v698 = vunpack.c.l.b16 %v570
  %v699 = vunpack.c.l.b16 %v571
  %v700 = vunpack.c.l.b16 %v572
  %v701 = vunpack.c.l.b16 %v573
  %v702 = vunpack.c.l.b16 %v574
  %v703 = vunpack.c.l.b16 %v575
  %v704 = vunpack.c.l.b16 %v576
  %v705 = vunpack.c.l.b16 %v577
  %v706 = vunpack.c.l.b16 %v578
  %v707 = vunpack.c.l.b16 %v579
  %v708 = vunpack.c.l.b16 %v580
  %v709 = vunpack.c.l.b16 %v581
  %v710 = vunpack.c.l.b16 %v582
  %v711 = vunpack.c.l.b16 %v583
  %v712 = vunpack.c.l.b16 %v584
  %v713 = vunpack.c.l.b16 %v585
  %v714 = vunpack.c.l.b16 %v586
  %v715 = vunpack.c.l.b16 %v587
  %v716 = vunpack.c.l.b16 %v588
  %v717 = vunpack.c.l.b16 %v589
  %v718 = vunpack.c.l.b16 %v590
  %v719 = vunpack.c.l.b16 %v591
  %v720 = vunpack.c.l.b16 %v592
  %v721 = vunpack.c.l.b16 %v593
  %v722 = vunpack.c.l.b16 %v594
  %v723 = vunpack.c.l.b16 %v595
  %v724 = vunpack.c.l.b16 %v596
  %v725 = vunpack.c.l.b16 %v597
  %v726 = vunpack.c.l.b16 %v598
  %v727 = vunpack.c.l.b16 %v599
  %v728 = vunpack.c.l.b16 %v600
  %v729 = vunpack.c.l.b16 %v601
  %v730 = vunpack.c.l.b16 %v602
  %v731 = vunpack.c.l.b16 %v603
  %v732 = vunpack.c.l.b16 %v604
  %v733 = vunpack.c.l.b16 %v605
  %v734 = vunpack.c.l.b16 %v606
  %v735 = vunpack.c.l.b16 %v607
  %v736 = vunpack.c.l.b16 %v608
  %v737 = vunpack.c.l.b16 %v609
  %v738 = vunpack.c.l.b16 %v610
  %v739 = vunpack.c.l.b16 %v611
  %v740 = vunpack.c.l.b16 %v612
  %v741 = vunpack.c.l.b16 %v613
  %v742 = vunpack.c.l.b16 %v614
  %v743 = vunpack.c.l.b16 %v615
  %v744 = vunpack.c.l.b16 %v616
  %v745 = vunpack.c.l.b16 %v617
  %v746 = vunpack.c.l.b16 %v618
  %v747 = vunpack.c.l.b16 %v619
  %v748 = vunpack.c.l.b16 %v620
  %v749 = vpack.c.b16 %v686, %v685
  %v750 = vpack.c.b16 %v688, %v687
  %v751 = vpack.c.b16 %v690, %v689
  %v752 = vpack.c.b16 %v692, %v691
  %v753 = vpack.c.b16 %v694, %v693
  %v754 = vpack.c.b16 %v696, %v695
  %v755 = vpack.c.b16 %v698, %v697
  %v756 = vpack.c.b16 %v700, %v699
  %v757 = vpack.c.b16 %v702, %v701
  %v758 = vpack.c.b16 %v704, %v703
  %v759 = vpack.c.b16 %v706, %v705
  %v760 = vpack.c.b16 %v708, %v707
  %v761 = vpack.c.b16 %v710, %v709
  %v762 = vpack.c.b16 %v712, %v711
  %v763 = vpack.c.b16 %v714, %v713
  %v764 = vpack.c.b16 %v716, %v715
  %v765 = vpack.c.b16 %v718, %v717
  %v766 = vpack.c.b16 %v720, %v719
  %v767 = vpack.c.b16 %v722, %v721
  %v768 = vpack.c.b16 %v724, %v723
  %v769 = vpack.c.b16 %v726, %v725
  %v770 = vpack.c.b16 %v728, %v727
  %v771 = vpack.c.b16 %v730, %v729
  %v772 = vpack.c.b16 %v732, %v731
  %v773 = vpack.c.b16 %v734, %v733
  %v774 = vpack.c.b16 %v736, %v735
  %v775 = vpack.c.b16 %v738, %v737
  %v776 = vpack.c.b16 %v740, %v739
  %v777 = vpack.c.b16 %v742, %v741
  %v778 = vpack.c.b16 %v744, %v743
  %v779 = vpack.c.b16 %v746, %v745
  %v780 = vpack.c.b16 %v748, %v747
  %813 = vmatprep.subr.bf16.mxu0 0
  %814 = vmatpush1.bf16.msra.mxu0 %v749
  %815 = vmatprep.subr.bf16.mxu0 0
  %816 = vmatpush1.bf16.msra.mxu0 %v750
  %817 = vmatprep.subr.bf16.mxu0 0
  %818 = vmatpush1.bf16.msra.mxu0 %v751
  %819 = vmatprep.subr.bf16.mxu0 0
  %820 = vmatpush1.bf16.msra.mxu0 %v752
  %821 = vmatprep.subr.bf16.mxu0 0
  %822 = vmatpush1.bf16.msra.mxu0 %v753
  %823 = vmatprep.subr.bf16.mxu0 0
  %824 = vmatpush1.bf16.msra.mxu0 %v754
  %825 = vmatprep.subr.bf16.mxu0 0
  %826 = vmatpush1.bf16.msra.mxu0 %v755
  %827 = vmatprep.subr.bf16.mxu0 0
  %828 = vmatpush1.bf16.msra.mxu0 %v756
  %829 = vmatprep.subr.bf16.mxu0 0
  %830 = vmatpush1.bf16.msra.mxu0 %v757
  %831 = vmatprep.subr.bf16.mxu0 0
  %832 = vmatpush1.bf16.msra.mxu0 %v758
  %833 = vmatprep.subr.bf16.mxu0 0
  %834 = vmatpush1.bf16.msra.mxu0 %v759
  %835 = vmatprep.subr.bf16.mxu0 0
  %836 = vmatpush1.bf16.msra.mxu0 %v760
  %837 = vmatprep.subr.bf16.mxu0 0
  %838 = vmatpush1.bf16.msra.mxu0 %v761
  %839 = vmatprep.subr.bf16.mxu0 0
  %840 = vmatpush1.bf16.msra.mxu0 %v762
  %841 = vmatprep.subr.bf16.mxu0 0
  %842 = vmatpush1.bf16.msra.mxu0 %v763
  %843 = vmatprep.subr.bf16.mxu0 0
  %844 = vmatpush1.bf16.msra.mxu0 %v764
  %845 = vmatprep.mubr.bf16.mxu0 %v217
  %846 = vmatmul.mubr.bf16.gmra.mrb[0].mxu0 %v216
  %v847 = vpop.f32.mrb[0].mxu0
  %v848 = vadd.f32 0.0, %v847
  %v849 = vpop.f32.mrb[0].mxu0
  %v850 = vpop.f32.mrb[0].mxu0
  %v851 = vpop.f32.mrb[0].mxu0
  %852 = vdwg.mxu0
  %853 = vmatprep.subr.bf16.mxu0 0
  %854 = vmatpush1.bf16.msra.mxu0 %v765
  %855 = vmatprep.subr.bf16.mxu0 0
  %856 = vmatpush1.bf16.msra.mxu0 %v766
  %857 = vmatprep.subr.bf16.mxu0 0
  %858 = vmatpush1.bf16.msra.mxu0 %v767
  %859 = vmatprep.subr.bf16.mxu0 0
  %860 = vmatpush1.bf16.msra.mxu0 %v768
  %861 = vmatprep.subr.bf16.mxu0 0
  %862 = vmatpush1.bf16.msra.mxu0 %v769
  %863 = vmatprep.subr.bf16.mxu0 0
  %864 = vmatpush1.bf16.msra.mxu0 %v770
  %865 = vmatprep.subr.bf16.mxu0 0
  %866 = vmatpush1.bf16.msra.mxu0 %v771
  %867 = vmatprep.subr.bf16.mxu0 0
  %868 = vmatpush1.bf16.msra.mxu0 %v772
  %869 = vmatprep.subr.bf16.mxu0 0
  %870 = vmatpush1.bf16.msra.mxu0 %v773
  %871 = vmatprep.subr.bf16.mxu0 0
  %872 = vmatpush1.bf16.msra.mxu0 %v774
  %873 = vmatprep.subr.bf16.mxu0 0
  %874 = vmatpush1.bf16.msra.mxu0 %v775
  %875 = vmatprep.subr.bf16.mxu0 0
  %876 = vmatpush1.bf16.msra.mxu0 %v776
  %877 = vmatprep.subr.bf16.mxu0 0
  %878 = vmatpush1.bf16.msra.mxu0 %v777
  %879 = vmatprep.subr.bf16.mxu0 0
  %880 = vmatpush1.bf16.msra.mxu0 %v778
  %881 = vmatprep.subr.bf16.mxu0 0
  %882 = vmatpush1.bf16.msra.mxu0 %v779
  %883 = vmatprep.subr.bf16.mxu0 0
  %884 = vmatpush1.bf16.msra.mxu0 %v780
  %885 = vmatprep.mubr.bf16.mxu0 %v219
  %886 = vmatmul.mubr.bf16.gmra.mrb[0].mxu0 %v218
  %v887 = vpop.f32.mrb[0].mxu0
  %v888 = vadd.f32 %v848, %v887
  %v889 = vpop.f32.mrb[0].mxu0
  %v890 = vpop.f32.mrb[0].mxu0
  %v891 = vpop.f32.mrb[0].mxu0
  %892 = vdwg.mxu0
  %s893 = scalar_lea.vmem %s3, 512
  %v894 = vld [vmem:[%s893] sm:$0xf]
  %v895 = vld [vmem:[%s893 + $0x4] sm:$0xf]
  %v896 = vld [vmem:[%s893 + $0x8] sm:$0xf]
  %v897 = vld [vmem:[%s893 + $0xc] sm:$0xf]
  %v898 = vld [vmem:[%s893 + $0x10] sm:$0xf]
  %v899 = vld [vmem:[%s893 + $0x14] sm:$0xf]
  %v900 = vld [vmem:[%s893 + $0x18] sm:$0xf]
  %v901 = vld [vmem:[%s893 + $0x1c] sm:$0xf]
  %v902 = vld [vmem:[%s893 + $0x20] sm:$0xf]
  %v903 = vld [vmem:[%s893 + $0x24] sm:$0xf]
  %v904 = vld [vmem:[%s893 + $0x28] sm:$0xf]
  %v905 = vld [vmem:[%s893 + $0x2c] sm:$0xf]
  %v906 = vld [vmem:[%s893 + $0x30] sm:$0xf]
  %v907 = vld [vmem:[%s893 + $0x34] sm:$0xf]
  %v908 = vld [vmem:[%s893 + $0x38] sm:$0xf]
  %v909 = vld [vmem:[%s893 + $0x3c] sm:$0xf]
  %v910 = vld [vmem:[%s893 + $0x40] sm:$0xf]
  %v911 = vld [vmem:[%s893 + $0x44] sm:$0xf]
  %v912 = vld [vmem:[%s893 + $0x48] sm:$0xf]
  %v913 = vld [vmem:[%s893 + $0x4c] sm:$0xf]
  %v914 = vld [vmem:[%s893 + $0x50] sm:$0xf]
  %v915 = vld [vmem:[%s893 + $0x54] sm:$0xf]
  %v916 = vld [vmem:[%s893 + $0x58] sm:$0xf]
  %v917 = vld [vmem:[%s893 + $0x5c] sm:$0xf]
  %v918 = vld [vmem:[%s893 + $0x60] sm:$0xf]
  %v919 = vld [vmem:[%s893 + $0x64] sm:$0xf]
  %v920 = vld [vmem:[%s893 + $0x68] sm:$0xf]
  %v921 = vld [vmem:[%s893 + $0x6c] sm:$0xf]
  %v922 = vld [vmem:[%s893 + $0x70] sm:$0xf]
  %v923 = vld [vmem:[%s893 + $0x74] sm:$0xf]
  %v924 = vld [vmem:[%s893 + $0x78] sm:$0xf]
  %v925 = vld [vmem:[%s893 + $0x7c] sm:$0xf]
  %v926 = vld [vmem:[%s893 + $0x80] sm:$0xf]
  %v927 = vld [vmem:[%s893 + $0x84] sm:$0xf]
  %v928 = vld [vmem:[%s893 + $0x88] sm:$0xf]
  %v929 = vld [vmem:[%s893 + $0x8c] sm:$0xf]
  %v930 = vld [vmem:[%s893 + $0x90] sm:$0xf]
  %v931 = vld [vmem:[%s893 + $0x94] sm:$0xf]
  %v932 = vld [vmem:[%s893 + $0x98] sm:$0xf]
  %v933 = vld [vmem:[%s893 + $0x9c] sm:$0xf]
  %v934 = vld [vmem:[%s893 + $0xa0] sm:$0xf]
  %v935 = vld [vmem:[%s893 + $0xa4] sm:$0xf]
  %v936 = vld [vmem:[%s893 + $0xa8] sm:$0xf]
  %v937 = vld [vmem:[%s893 + $0xac] sm:$0xf]
  %v938 = vld [vmem:[%s893 + $0xb0] sm:$0xf]
  %v939 = vld [vmem:[%s893 + $0xb4] sm:$0xf]
  %v940 = vld [vmem:[%s893 + $0xb8] sm:$0xf]
  %v941 = vld [vmem:[%s893 + $0xbc] sm:$0xf]
  %v942 = vld [vmem:[%s893 + $0xc0] sm:$0xf]
  %v943 = vld [vmem:[%s893 + $0xc4] sm:$0xf]
  %v944 = vld [vmem:[%s893 + $0xc8] sm:$0xf]
  %v945 = vld [vmem:[%s893 + $0xcc] sm:$0xf]
  %v946 = vld [vmem:[%s893 + $0xd0] sm:$0xf]
  %v947 = vld [vmem:[%s893 + $0xd4] sm:$0xf]
  %v948 = vld [vmem:[%s893 + $0xd8] sm:$0xf]
  %v949 = vld [vmem:[%s893 + $0xdc] sm:$0xf]
  %v950 = vld [vmem:[%s893 + $0xe0] sm:$0xf]
  %v951 = vld [vmem:[%s893 + $0xe4] sm:$0xf]
  %v952 = vld [vmem:[%s893 + $0xe8] sm:$0xf]
  %v953 = vld [vmem:[%s893 + $0xec] sm:$0xf]
  %v954 = vld [vmem:[%s893 + $0xf0] sm:$0xf]
  %v955 = vld [vmem:[%s893 + $0xf4] sm:$0xf]
  %v956 = vld [vmem:[%s893 + $0xf8] sm:$0xf]
  %v957 = vld [vmem:[%s893 + $0xfc] sm:$0xf]
  %v1022 = vunpack.c.l.b16 %v894
  %v1023 = vunpack.c.l.b16 %v895
  %v1024 = vunpack.c.l.b16 %v896
  %v1025 = vunpack.c.l.b16 %v897
  %v1026 = vunpack.c.l.b16 %v898
  %v1027 = vunpack.c.l.b16 %v899
  %v1028 = vunpack.c.l.b16 %v900
  %v1029 = vunpack.c.l.b16 %v901
  %v1030 = vunpack.c.l.b16 %v902
  %v1031 = vunpack.c.l.b16 %v903
  %v1032 = vunpack.c.l.b16 %v904
  %v1033 = vunpack.c.l.b16 %v905
  %v1034 = vunpack.c.l.b16 %v906
  %v1035 = vunpack.c.l.b16 %v907
  %v1036 = vunpack.c.l.b16 %v908
  %v1037 = vunpack.c.l.b16 %v909
  %v1038 = vunpack.c.l.b16 %v910
  %v1039 = vunpack.c.l.b16 %v911
  %v1040 = vunpack.c.l.b16 %v912
  %v1041 = vunpack.c.l.b16 %v913
  %v1042 = vunpack.c.l.b16 %v914
  %v1043 = vunpack.c.l.b16 %v915
  %v1044 = vunpack.c.l.b16 %v916
  %v1045 = vunpack.c.l.b16 %v917
  %v1046 = vunpack.c.l.b16 %v918
  %v1047 = vunpack.c.l.b16 %v919
  %v1048 = vunpack.c.l.b16 %v920
  %v1049 = vunpack.c.l.b16 %v921
  %v1050 = vunpack.c.l.b16 %v922
  %v1051 = vunpack.c.l.b16 %v923
  %v1052 = vunpack.c.l.b16 %v924
  %v1053 = vunpack.c.l.b16 %v925
  %v1054 = vunpack.c.l.b16 %v926
  %v1055 = vunpack.c.l.b16 %v927
  %v1056 = vunpack.c.l.b16 %v928
  %v1057 = vunpack.c.l.b16 %v929
  %v1058 = vunpack.c.l.b16 %v930
  %v1059 = vunpack.c.l.b16 %v931
  %v1060 = vunpack.c.l.b16 %v932
  %v1061 = vunpack.c.l.b16 %v933
  %v1062 = vunpack.c.l.b16 %v934
  %v1063 = vunpack.c.l.b16 %v935
  %v1064 = vunpack.c.l.b16 %v936
  %v1065 = vunpack.c.l.b16 %v937
  %v1066 = vunpack.c.l.b16 %v938
  %v1067 = vunpack.c.l.b16 %v939
  %v1068 = vunpack.c.l.b16 %v940
  %v1069 = vunpack.c.l.b16 %v941
  %v1070 = vunpack.c.l.b16 %v942
  %v1071 = vunpack.c.l.b16 %v943
  %v1072 = vunpack.c.l.b16 %v944
  %v1073 = vunpack.c.l.b16 %v945
  %v1074 = vunpack.c.l.b16 %v946
  %v1075 = vunpack.c.l.b16 %v947
  %v1076 = vunpack.c.l.b16 %v948
  %v1077 = vunpack.c.l.b16 %v949
  %v1078 = vunpack.c.l.b16 %v950
  %v1079 = vunpack.c.l.b16 %v951
  %v1080 = vunpack.c.l.b16 %v952
  %v1081 = vunpack.c.l.b16 %v953
  %v1082 = vunpack.c.l.b16 %v954
  %v1083 = vunpack.c.l.b16 %v955
  %v1084 = vunpack.c.l.b16 %v956
  %v1085 = vunpack.c.l.b16 %v957
  %v1086 = vpack.c.b16 %v1023, %v1022
  %v1087 = vpack.c.b16 %v1025, %v1024
  %v1088 = vpack.c.b16 %v1027, %v1026
  %v1089 = vpack.c.b16 %v1029, %v1028
  %v1090 = vpack.c.b16 %v1031, %v1030
  %v1091 = vpack.c.b16 %v1033, %v1032
  %v1092 = vpack.c.b16 %v1035, %v1034
  %v1093 = vpack.c.b16 %v1037, %v1036
  %v1094 = vpack.c.b16 %v1039, %v1038
  %v1095 = vpack.c.b16 %v1041, %v1040
  %v1096 = vpack.c.b16 %v1043, %v1042
  %v1097 = vpack.c.b16 %v1045, %v1044
  %v1098 = vpack.c.b16 %v1047, %v1046
  %v1099 = vpack.c.b16 %v1049, %v1048
  %v1100 = vpack.c.b16 %v1051, %v1050
  %v1101 = vpack.c.b16 %v1053, %v1052
  %v1102 = vpack.c.b16 %v1055, %v1054
  %v1103 = vpack.c.b16 %v1057, %v1056
  %v1104 = vpack.c.b16 %v1059, %v1058
  %v1105 = vpack.c.b16 %v1061, %v1060
  %v1106 = vpack.c.b16 %v1063, %v1062
  %v1107 = vpack.c.b16 %v1065, %v1064
  %v1108 = vpack.c.b16 %v1067, %v1066
  %v1109 = vpack.c.b16 %v1069, %v1068
  %v1110 = vpack.c.b16 %v1071, %v1070
  %v1111 = vpack.c.b16 %v1073, %v1072
  %v1112 = vpack.c.b16 %v1075, %v1074
  %v1113 = vpack.c.b16 %v1077, %v1076
  %v1114 = vpack.c.b16 %v1079, %v1078
  %v1115 = vpack.c.b16 %v1081, %v1080
  %v1116 = vpack.c.b16 %v1083, %v1082
  %v1117 = vpack.c.b16 %v1085, %v1084
  %1150 = vmatprep.subr.bf16.mxu0 0
  %1151 = vmatpush1.bf16.msra.mxu0 %v1086
  %1152 = vmatprep.subr.bf16.mxu0 0
  %1153 = vmatpush1.bf16.msra.mxu0 %v1087
  %1154 = vmatprep.subr.bf16.mxu0 0
  %1155 = vmatpush1.bf16.msra.mxu0 %v1088
  %1156 = vmatprep.subr.bf16.mxu0 0
  %1157 = vmatpush1.bf16.msra.mxu0 %v1089
  %1158 = vmatprep.subr.bf16.mxu0 0
  %1159 = vmatpush1.bf16.msra.mxu0 %v1090
  %1160 = vmatprep.subr.bf16.mxu0 0
  %1161 = vmatpush1.bf16.msra.mxu0 %v1091
  %1162 = vmatprep.subr.bf16.mxu0 0
  %1163 = vmatpush1.bf16.msra.mxu0 %v1092
  %1164 = vmatprep.subr.bf16.mxu0 0
  %1165 = vmatpush1.bf16.msra.mxu0 %v1093
  %1166 = vmatprep.subr.bf16.mxu0 0
  %1167 = vmatpush1.bf16.msra.mxu0 %v1094
  %1168 = vmatprep.subr.bf16.mxu0 0
  %1169 = vmatpush1.bf16.msra.mxu0 %v1095
  %1170 = vmatprep.subr.bf16.mxu0 0
  %1171 = vmatpush1.bf16.msra.mxu0 %v1096
  %1172 = vmatprep.subr.bf16.mxu0 0
  %1173 = vmatpush1.bf16.msra.mxu0 %v1097
  %1174 = vmatprep.subr.bf16.mxu0 0
  %1175 = vmatpush1.bf16.msra.mxu0 %v1098
  %1176 = vmatprep.subr.bf16.mxu0 0
  %1177 = vmatpush1.bf16.msra.mxu0 %v1099
  %1178 = vmatprep.subr.bf16.mxu0 0
  %1179 = vmatpush1.bf16.msra.mxu0 %v1100
  %1180 = vmatprep.subr.bf16.mxu0 0
  %1181 = vmatpush1.bf16.msra.mxu0 %v1101
  %1182 = vmatprep.mubr.bf16.mxu0 %v217
  %1183 = vmatmul.mubr.bf16.gmra.mrb[0].mxu0 %v216
  %v1184 = vpop.f32.mrb[0].mxu0
  %v1185 = vadd.f32 0.0, %v1184
  %v1186 = vpop.f32.mrb[0].mxu0
  %v1187 = vpop.f32.mrb[0].mxu0
  %v1188 = vpop.f32.mrb[0].mxu0
  %1189 = vdwg.mxu0
  %1190 = vmatprep.subr.bf16.mxu0 0
  %1191 = vmatpush1.bf16.msra.mxu0 %v1102
  %1192 = vmatprep.subr.bf16.mxu0 0
  %1193 = vmatpush1.bf16.msra.mxu0 %v1103
  %1194 = vmatprep.subr.bf16.mxu0 0
  %1195 = vmatpush1.bf16.msra.mxu0 %v1104
  %1196 = vmatprep.subr.bf16.mxu0 0
  %1197 = vmatpush1.bf16.msra.mxu0 %v1105
  %1198 = vmatprep.subr.bf16.mxu0 0
  %1199 = vmatpush1.bf16.msra.mxu0 %v1106
  %1200 = vmatprep.subr.bf16.mxu0 0
  %1201 = vmatpush1.bf16.msra.mxu0 %v1107
  %1202 = vmatprep.subr.bf16.mxu0 0
  %1203 = vmatpush1.bf16.msra.mxu0 %v1108
  %1204 = vmatprep.subr.bf16.mxu0 0
  %1205 = vmatpush1.bf16.msra.mxu0 %v1109
  %1206 = vmatprep.subr.bf16.mxu0 0
  %1207 = vmatpush1.bf16.msra.mxu0 %v1110
  %1208 = vmatprep.subr.bf16.mxu0 0
  %1209 = vmatpush1.bf16.msra.mxu0 %v1111
  %1210 = vmatprep.subr.bf16.mxu0 0
  %1211 = vmatpush1.bf16.msra.mxu0 %v1112
  %1212 = vmatprep.subr.bf16.mxu0 0
  %1213 = vmatpush1.bf16.msra.mxu0 %v1113
  %1214 = vmatprep.subr.bf16.mxu0 0
  %1215 = vmatpush1.bf16.msra.mxu0 %v1114
  %1216 = vmatprep.subr.bf16.mxu0 0
  %1217 = vmatpush1.bf16.msra.mxu0 %v1115
  %1218 = vmatprep.subr.bf16.mxu0 0
  %1219 = vmatpush1.bf16.msra.mxu0 %v1116
  %1220 = vmatprep.subr.bf16.mxu0 0
  %1221 = vmatpush1.bf16.msra.mxu0 %v1117
  %1222 = vmatprep.mubr.bf16.mxu0 %v219
  %1223 = vmatmul.mubr.bf16.gmra.mrb[0].mxu0 %v218
  %v1224 = vpop.f32.mrb[0].mxu0
  %v1225 = vadd.f32 %v1185, %v1224
  %v1226 = vpop.f32.mrb[0].mxu0
  %v1227 = vpop.f32.mrb[0].mxu0
  %v1228 = vpop.f32.mrb[0].mxu0
  %1229 = vdwg.mxu0
  %s1230 = scalar_lea.vmem %s3, 768
  %v1231 = vld [vmem:[%s1230] sm:$0xf]
  %v1232 = vld [vmem:[%s1230 + $0x4] sm:$0xf]
  %v1233 = vld [vmem:[%s1230 + $0x8] sm:$0xf]
  %v1234 = vld [vmem:[%s1230 + $0xc] sm:$0xf]
  %v1235 = vld [vmem:[%s1230 + $0x10] sm:$0xf]
  %v1236 = vld [vmem:[%s1230 + $0x14] sm:$0xf]
  %v1237 = vld [vmem:[%s1230 + $0x18] sm:$0xf]
  %v1238 = vld [vmem:[%s1230 + $0x1c] sm:$0xf]
  %v1239 = vld [vmem:[%s1230 + $0x20] sm:$0xf]
  %v1240 = vld [vmem:[%s1230 + $0x24] sm:$0xf]
  %v1241 = vld [vmem:[%s1230 + $0x28] sm:$0xf]
  %v1242 = vld [vmem:[%s1230 + $0x2c] sm:$0xf]
  %v1243 = vld [vmem:[%s1230 + $0x30] sm:$0xf]
  %v1244 = vld [vmem:[%s1230 + $0x34] sm:$0xf]
  %v1245 = vld [vmem:[%s1230 + $0x38] sm:$0xf]
  %v1246 = vld [vmem:[%s1230 + $0x3c] sm:$0xf]
  %v1247 = vld [vmem:[%s1230 + $0x40] sm:$0xf]
  %v1248 = vld [vmem:[%s1230 + $0x44] sm:$0xf]
  %v1249 = vld [vmem:[%s1230 + $0x48] sm:$0xf]
  %v1250 = vld [vmem:[%s1230 + $0x4c] sm:$0xf]
  %v1251 = vld [vmem:[%s1230 + $0x50] sm:$0xf]
  %v1252 = vld [vmem:[%s1230 + $0x54] sm:$0xf]
  %v1253 = vld [vmem:[%s1230 + $0x58] sm:$0xf]
  %v1254 = vld [vmem:[%s1230 + $0x5c] sm:$0xf]
  %v1255 = vld [vmem:[%s1230 + $0x60] sm:$0xf]
  %v1256 = vld [vmem:[%s1230 + $0x64] sm:$0xf]
  %v1257 = vld [vmem:[%s1230 + $0x68] sm:$0xf]
  %v1258 = vld [vmem:[%s1230 + $0x6c] sm:$0xf]
  %v1259 = vld [vmem:[%s1230 + $0x70] sm:$0xf]
  %v1260 = vld [vmem:[%s1230 + $0x74] sm:$0xf]
  %v1261 = vld [vmem:[%s1230 + $0x78] sm:$0xf]
  %v1262 = vld [vmem:[%s1230 + $0x7c] sm:$0xf]
  %v1263 = vld [vmem:[%s1230 + $0x80] sm:$0xf]
  %v1264 = vld [vmem:[%s1230 + $0x84] sm:$0xf]
  %v1265 = vld [vmem:[%s1230 + $0x88] sm:$0xf]
  %v1266 = vld [vmem:[%s1230 + $0x8c] sm:$0xf]
  %v1267 = vld [vmem:[%s1230 + $0x90] sm:$0xf]
  %v1268 = vld [vmem:[%s1230 + $0x94] sm:$0xf]
  %v1269 = vld [vmem:[%s1230 + $0x98] sm:$0xf]
  %v1270 = vld [vmem:[%s1230 + $0x9c] sm:$0xf]
  %v1271 = vld [vmem:[%s1230 + $0xa0] sm:$0xf]
  %v1272 = vld [vmem:[%s1230 + $0xa4] sm:$0xf]
  %v1273 = vld [vmem:[%s1230 + $0xa8] sm:$0xf]
  %v1274 = vld [vmem:[%s1230 + $0xac] sm:$0xf]
  %v1275 = vld [vmem:[%s1230 + $0xb0] sm:$0xf]
  %v1276 = vld [vmem:[%s1230 + $0xb4] sm:$0xf]
  %v1277 = vld [vmem:[%s1230 + $0xb8] sm:$0xf]
  %v1278 = vld [vmem:[%s1230 + $0xbc] sm:$0xf]
  %v1279 = vld [vmem:[%s1230 + $0xc0] sm:$0xf]
  %v1280 = vld [vmem:[%s1230 + $0xc4] sm:$0xf]
  %v1281 = vld [vmem:[%s1230 + $0xc8] sm:$0xf]
  %v1282 = vld [vmem:[%s1230 + $0xcc] sm:$0xf]
  %v1283 = vld [vmem:[%s1230 + $0xd0] sm:$0xf]
  %v1284 = vld [vmem:[%s1230 + $0xd4] sm:$0xf]
  %v1285 = vld [vmem:[%s1230 + $0xd8] sm:$0xf]
  %v1286 = vld [vmem:[%s1230 + $0xdc] sm:$0xf]
  %v1287 = vld [vmem:[%s1230 + $0xe0] sm:$0xf]
  %v1288 = vld [vmem:[%s1230 + $0xe4] sm:$0xf]
  %v1289 = vld [vmem:[%s1230 + $0xe8] sm:$0xf]
  %v1290 = vld [vmem:[%s1230 + $0xec] sm:$0xf]
  %v1291 = vld [vmem:[%s1230 + $0xf0] sm:$0xf]
  %v1292 = vld [vmem:[%s1230 + $0xf4] sm:$0xf]
  %v1293 = vld [vmem:[%s1230 + $0xf8] sm:$0xf]
  %v1294 = vld [vmem:[%s1230 + $0xfc] sm:$0xf]
  %v1359 = vunpack.c.l.b16 %v1231
  %v1360 = vunpack.c.l.b16 %v1232
  %v1361 = vunpack.c.l.b16 %v1233
  %v1362 = vunpack.c.l.b16 %v1234
  %v1363 = vunpack.c.l.b16 %v1235
  %v1364 = vunpack.c.l.b16 %v1236
  %v1365 = vunpack.c.l.b16 %v1237
  %v1366 = vunpack.c.l.b16 %v1238
  %v1367 = vunpack.c.l.b16 %v1239
  %v1368 = vunpack.c.l.b16 %v1240
  %v1369 = vunpack.c.l.b16 %v1241
  %v1370 = vunpack.c.l.b16 %v1242
  %v1371 = vunpack.c.l.b16 %v1243
  %v1372 = vunpack.c.l.b16 %v1244
  %v1373 = vunpack.c.l.b16 %v1245
  %v1374 = vunpack.c.l.b16 %v1246
  %v1375 = vunpack.c.l.b16 %v1247
  %v1376 = vunpack.c.l.b16 %v1248
  %v1377 = vunpack.c.l.b16 %v1249
  %v1378 = vunpack.c.l.b16 %v1250
  %v1379 = vunpack.c.l.b16 %v1251
  %v1380 = vunpack.c.l.b16 %v1252
  %v1381 = vunpack.c.l.b16 %v1253
  %v1382 = vunpack.c.l.b16 %v1254
  %v1383 = vunpack.c.l.b16 %v1255
  %v1384 = vunpack.c.l.b16 %v1256
  %v1385 = vunpack.c.l.b16 %v1257
  %v1386 = vunpack.c.l.b16 %v1258
  %v1387 = vunpack.c.l.b16 %v1259
  %v1388 = vunpack.c.l.b16 %v1260
  %v1389 = vunpack.c.l.b16 %v1261
  %v1390 = vunpack.c.l.b16 %v1262
  %v1391 = vunpack.c.l.b16 %v1263
  %v1392 = vunpack.c.l.b16 %v1264
  %v1393 = vunpack.c.l.b16 %v1265
  %v1394 = vunpack.c.l.b16 %v1266
  %v1395 = vunpack.c.l.b16 %v1267
  %v1396 = vunpack.c.l.b16 %v1268
  %v1397 = vunpack.c.l.b16 %v1269
  %v1398 = vunpack.c.l.b16 %v1270
  %v1399 = vunpack.c.l.b16 %v1271
  %v1400 = vunpack.c.l.b16 %v1272
  %v1401 = vunpack.c.l.b16 %v1273
  %v1402 = vunpack.c.l.b16 %v1274
  %v1403 = vunpack.c.l.b16 %v1275
  %v1404 = vunpack.c.l.b16 %v1276
  %v1405 = vunpack.c.l.b16 %v1277
  %v1406 = vunpack.c.l.b16 %v1278
  %v1407 = vunpack.c.l.b16 %v1279
  %v1408 = vunpack.c.l.b16 %v1280
  %v1409 = vunpack.c.l.b16 %v1281
  %v1410 = vunpack.c.l.b16 %v1282
  %v1411 = vunpack.c.l.b16 %v1283
  %v1412 = vunpack.c.l.b16 %v1284
  %v1413 = vunpack.c.l.b16 %v1285
  %v1414 = vunpack.c.l.b16 %v1286
  %v1415 = vunpack.c.l.b16 %v1287
  %v1416 = vunpack.c.l.b16 %v1288
  %v1417 = vunpack.c.l.b16 %v1289
  %v1418 = vunpack.c.l.b16 %v1290
  %v1419 = vunpack.c.l.b16 %v1291
  %v1420 = vunpack.c.l.b16 %v1292
  %v1421 = vunpack.c.l.b16 %v1293
  %v1422 = vunpack.c.l.b16 %v1294
  %v1423 = vpack.c.b16 %v1360, %v1359
  %v1424 = vpack.c.b16 %v1362, %v1361
  %v1425 = vpack.c.b16 %v1364, %v1363
  %v1426 = vpack.c.b16 %v1366, %v1365
  %v1427 = vpack.c.b16 %v1368, %v1367
  %v1428 = vpack.c.b16 %v1370, %v1369
  %v1429 = vpack.c.b16 %v1372, %v1371
  %v1430 = vpack.c.b16 %v1374, %v1373
  %v1431 = vpack.c.b16 %v1376, %v1375
  %v1432 = vpack.c.b16 %v1378, %v1377
  %v1433 = vpack.c.b16 %v1380, %v1379
  %v1434 = vpack.c.b16 %v1382, %v1381
  %v1435 = vpack.c.b16 %v1384, %v1383
  %v1436 = vpack.c.b16 %v1386, %v1385
  %v1437 = vpack.c.b16 %v1388, %v1387
  %v1438 = vpack.c.b16 %v1390, %v1389
  %v1439 = vpack.c.b16 %v1392, %v1391
  %v1440 = vpack.c.b16 %v1394, %v1393
  %v1441 = vpack.c.b16 %v1396, %v1395
  %v1442 = vpack.c.b16 %v1398, %v1397
  %v1443 = vpack.c.b16 %v1400, %v1399
  %v1444 = vpack.c.b16 %v1402, %v1401
  %v1445 = vpack.c.b16 %v1404, %v1403
  %v1446 = vpack.c.b16 %v1406, %v1405
  %v1447 = vpack.c.b16 %v1408, %v1407
  %v1448 = vpack.c.b16 %v1410, %v1409
  %v1449 = vpack.c.b16 %v1412, %v1411
  %v1450 = vpack.c.b16 %v1414, %v1413
  %v1451 = vpack.c.b16 %v1416, %v1415
  %v1452 = vpack.c.b16 %v1418, %v1417
  %v1453 = vpack.c.b16 %v1420, %v1419
  %v1454 = vpack.c.b16 %v1422, %v1421
  %1487 = vmatprep.subr.bf16.mxu0 0
  %1488 = vmatpush1.bf16.msra.mxu0 %v1423
  %1489 = vmatprep.subr.bf16.mxu0 0
  %1490 = vmatpush1.bf16.msra.mxu0 %v1424
  %1491 = vmatprep.subr.bf16.mxu0 0
  %1492 = vmatpush1.bf16.msra.mxu0 %v1425
  %1493 = vmatprep.subr.bf16.mxu0 0
  %1494 = vmatpush1.bf16.msra.mxu0 %v1426
  %1495 = vmatprep.subr.bf16.mxu0 0
  %1496 = vmatpush1.bf16.msra.mxu0 %v1427
  %1497 = vmatprep.subr.bf16.mxu0 0
  %1498 = vmatpush1.bf16.msra.mxu0 %v1428
  %1499 = vmatprep.subr.bf16.mxu0 0
  %1500 = vmatpush1.bf16.msra.mxu0 %v1429
  %1501 = vmatprep.subr.bf16.mxu0 0
  %1502 = vmatpush1.bf16.msra.mxu0 %v1430
  %1503 = vmatprep.subr.bf16.mxu0 0
  %1504 = vmatpush1.bf16.msra.mxu0 %v1431
  %1505 = vmatprep.subr.bf16.mxu0 0
  %1506 = vmatpush1.bf16.msra.mxu0 %v1432
  %1507 = vmatprep.subr.bf16.mxu0 0
  %1508 = vmatpush1.bf16.msra.mxu0 %v1433
  %1509 = vmatprep.subr.bf16.mxu0 0
  %1510 = vmatpush1.bf16.msra.mxu0 %v1434
  %1511 = vmatprep.subr.bf16.mxu0 0
  %1512 = vmatpush1.bf16.msra.mxu0 %v1435
  %1513 = vmatprep.subr.bf16.mxu0 0
  %1514 = vmatpush1.bf16.msra.mxu0 %v1436
  %1515 = vmatprep.subr.bf16.mxu0 0
  %1516 = vmatpush1.bf16.msra.mxu0 %v1437
  %1517 = vmatprep.subr.bf16.mxu0 0
  %1518 = vmatpush1.bf16.msra.mxu0 %v1438
  %1519 = vmatprep.mubr.bf16.mxu0 %v217
  %1520 = vmatmul.mubr.bf16.gmra.mrb[0].mxu0 %v216
  %v1521 = vpop.f32.mrb[0].mxu0
  %v1522 = vadd.f32 0.0, %v1521
  %v1523 = vpop.f32.mrb[0].mxu0
  %v1524 = vpop.f32.mrb[0].mxu0
  %v1525 = vpop.f32.mrb[0].mxu0
  %1526 = vdwg.mxu0
  %1527 = vmatprep.subr.bf16.mxu0 0
  %1528 = vmatpush1.bf16.msra.mxu0 %v1439
  %1529 = vmatprep.subr.bf16.mxu0 0
  %1530 = vmatpush1.bf16.msra.mxu0 %v1440
  %1531 = vmatprep.subr.bf16.mxu0 0
  %1532 = vmatpush1.bf16.msra.mxu0 %v1441
  %1533 = vmatprep.subr.bf16.mxu0 0
  %1534 = vmatpush1.bf16.msra.mxu0 %v1442
  %1535 = vmatprep.subr.bf16.mxu0 0
  %1536 = vmatpush1.bf16.msra.mxu0 %v1443
  %1537 = vmatprep.subr.bf16.mxu0 0
  %1538 = vmatpush1.bf16.msra.mxu0 %v1444
  %1539 = vmatprep.subr.bf16.mxu0 0
  %1540 = vmatpush1.bf16.msra.mxu0 %v1445
  %1541 = vmatprep.subr.bf16.mxu0 0
  %1542 = vmatpush1.bf16.msra.mxu0 %v1446
  %1543 = vmatprep.subr.bf16.mxu0 0
  %1544 = vmatpush1.bf16.msra.mxu0 %v1447
  %1545 = vmatprep.subr.bf16.mxu0 0
  %1546 = vmatpush1.bf16.msra.mxu0 %v1448
  %1547 = vmatprep.subr.bf16.mxu0 0
  %1548 = vmatpush1.bf16.msra.mxu0 %v1449
  %1549 = vmatprep.subr.bf16.mxu0 0
  %1550 = vmatpush1.bf16.msra.mxu0 %v1450
  %1551 = vmatprep.subr.bf16.mxu0 0
  %1552 = vmatpush1.bf16.msra.mxu0 %v1451
  %1553 = vmatprep.subr.bf16.mxu0 0
  %1554 = vmatpush1.bf16.msra.mxu0 %v1452
  %1555 = vmatprep.subr.bf16.mxu0 0
  %1556 = vmatpush1.bf16.msra.mxu0 %v1453
  %1557 = vmatprep.subr.bf16.mxu0 0
  %1558 = vmatpush1.bf16.msra.mxu0 %v1454
  %1559 = vmatprep.mubr.bf16.mxu0 %v219
  %1560 = vmatmul.mubr.bf16.gmra.mrb[0].mxu0 %v218
  %v1561 = vpop.f32.mrb[0].mxu0
  %v1562 = vadd.f32 %v1522, %v1561
  %v1563 = vpop.f32.mrb[0].mxu0
  %v1564 = vpop.f32.mrb[0].mxu0
  %v1565 = vpop.f32.mrb[0].mxu0
  %1566 = vdwg.mxu0
  %s1567 = scalar_lea.vmem %s3, 1024
  %v1568 = vld [vmem:[%s1567] sm:$0xf]
  %v1569 = vld [vmem:[%s1567 + $0x4] sm:$0xf]
  %v1570 = vld [vmem:[%s1567 + $0x8] sm:$0xf]
  %v1571 = vld [vmem:[%s1567 + $0xc] sm:$0xf]
  %v1572 = vld [vmem:[%s1567 + $0x10] sm:$0xf]
  %v1573 = vld [vmem:[%s1567 + $0x14] sm:$0xf]
  %v1574 = vld [vmem:[%s1567 + $0x18] sm:$0xf]
  %v1575 = vld [vmem:[%s1567 + $0x1c] sm:$0xf]
  %v1576 = vld [vmem:[%s1567 + $0x20] sm:$0xf]
  %v1577 = vld [vmem:[%s1567 + $0x24] sm:$0xf]
  %v1578 = vld [vmem:[%s1567 + $0x28] sm:$0xf]
  %v1579 = vld [vmem:[%s1567 + $0x2c] sm:$0xf]
  %v1580 = vld [vmem:[%s1567 + $0x30] sm:$0xf]
  %v1581 = vld [vmem:[%s1567 + $0x34] sm:$0xf]
  %v1582 = vld [vmem:[%s1567 + $0x38] sm:$0xf]
  %v1583 = vld [vmem:[%s1567 + $0x3c] sm:$0xf]
  %v1584 = vld [vmem:[%s1567 + $0x40] sm:$0xf]
  %v1585 = vld [vmem:[%s1567 + $0x44] sm:$0xf]
  %v1586 = vld [vmem:[%s1567 + $0x48] sm:$0xf]
  %v1587 = vld [vmem:[%s1567 + $0x4c] sm:$0xf]
  %v1588 = vld [vmem:[%s1567 + $0x50] sm:$0xf]
  %v1589 = vld [vmem:[%s1567 + $0x54] sm:$0xf]
  %v1590 = vld [vmem:[%s1567 + $0x58] sm:$0xf]
  %v1591 = vld [vmem:[%s1567 + $0x5c] sm:$0xf]
  %v1592 = vld [vmem:[%s1567 + $0x60] sm:$0xf]
  %v1593 = vld [vmem:[%s1567 + $0x64] sm:$0xf]
  %v1594 = vld [vmem:[%s1567 + $0x68] sm:$0xf]
  %v1595 = vld [vmem:[%s1567 + $0x6c] sm:$0xf]
  %v1596 = vld [vmem:[%s1567 + $0x70] sm:$0xf]
  %v1597 = vld [vmem:[%s1567 + $0x74] sm:$0xf]
  %v1598 = vld [vmem:[%s1567 + $0x78] sm:$0xf]
  %v1599 = vld [vmem:[%s1567 + $0x7c] sm:$0xf]
  %v1600 = vld [vmem:[%s1567 + $0x80] sm:$0xf]
  %v1601 = vld [vmem:[%s1567 + $0x84] sm:$0xf]
  %v1602 = vld [vmem:[%s1567 + $0x88] sm:$0xf]
  %v1603 = vld [vmem:[%s1567 + $0x8c] sm:$0xf]
  %v1604 = vld [vmem:[%s1567 + $0x90] sm:$0xf]
  %v1605 = vld [vmem:[%s1567 + $0x94] sm:$0xf]
  %v1606 = vld [vmem:[%s1567 + $0x98] sm:$0xf]
  %v1607 = vld [vmem:[%s1567 + $0x9c] sm:$0xf]
  %v1608 = vld [vmem:[%s1567 + $0xa0] sm:$0xf]
  %v1609 = vld [vmem:[%s1567 + $0xa4] sm:$0xf]
  %v1610 = vld [vmem:[%s1567 + $0xa8] sm:$0xf]
  %v1611 = vld [vmem:[%s1567 + $0xac] sm:$0xf]
  %v1612 = vld [vmem:[%s1567 + $0xb0] sm:$0xf]
  %v1613 = vld [vmem:[%s1567 + $0xb4] sm:$0xf]
  %v1614 = vld [vmem:[%s1567 + $0xb8] sm:$0xf]
  %v1615 = vld [vmem:[%s1567 + $0xbc] sm:$0xf]
  %v1616 = vld [vmem:[%s1567 + $0xc0] sm:$0xf]
  %v1617 = vld [vmem:[%s1567 + $0xc4] sm:$0xf]
  %v1618 = vld [vmem:[%s1567 + $0xc8] sm:$0xf]
  %v1619 = vld [vmem:[%s1567 + $0xcc] sm:$0xf]
  %v1620 = vld [vmem:[%s1567 + $0xd0] sm:$0xf]
  %v1621 = vld [vmem:[%s1567 + $0xd4] sm:$0xf]
  %v1622 = vld [vmem:[%s1567 + $0xd8] sm:$0xf]
  %v1623 = vld [vmem:[%s1567 + $0xdc] sm:$0xf]
  %v1624 = vld [vmem:[%s1567 + $0xe0] sm:$0xf]
  %v1625 = vld [vmem:[%s1567 + $0xe4] sm:$0xf]
  %v1626 = vld [vmem:[%s1567 + $0xe8] sm:$0xf]
  %v1627 = vld [vmem:[%s1567 + $0xec] sm:$0xf]
  %v1628 = vld [vmem:[%s1567 + $0xf0] sm:$0xf]
  %v1629 = vld [vmem:[%s1567 + $0xf4] sm:$0xf]
  %v1630 = vld [vmem:[%s1567 + $0xf8] sm:$0xf]
  %v1631 = vld [vmem:[%s1567 + $0xfc] sm:$0xf]
  %v1696 = vunpack.c.l.b16 %v1568
  %v1697 = vunpack.c.l.b16 %v1569
  %v1698 = vunpack.c.l.b16 %v1570
  %v1699 = vunpack.c.l.b16 %v1571
  %v1700 = vunpack.c.l.b16 %v1572
  %v1701 = vunpack.c.l.b16 %v1573
  %v1702 = vunpack.c.l.b16 %v1574
  %v1703 = vunpack.c.l.b16 %v1575
  %v1704 = vunpack.c.l.b16 %v1576
  %v1705 = vunpack.c.l.b16 %v1577
  %v1706 = vunpack.c.l.b16 %v1578
  %v1707 = vunpack.c.l.b16 %v1579
  %v1708 = vunpack.c.l.b16 %v1580
  %v1709 = vunpack.c.l.b16 %v1581
  %v1710 = vunpack.c.l.b16 %v1582
  %v1711 = vunpack.c.l.b16 %v1583
  %v1712 = vunpack.c.l.b16 %v1584
  %v1713 = vunpack.c.l.b16 %v1585
  %v1714 = vunpack.c.l.b16 %v1586
  %v1715 = vunpack.c.l.b16 %v1587
  %v1716 = vunpack.c.l.b16 %v1588
  %v1717 = vunpack.c.l.b16 %v1589
  %v1718 = vunpack.c.l.b16 %v1590
  %v1719 = vunpack.c.l.b16 %v1591
  %v1720 = vunpack.c.l.b16 %v1592
  %v1721 = vunpack.c.l.b16 %v1593
  %v1722 = vunpack.c.l.b16 %v1594
  %v1723 = vunpack.c.l.b16 %v1595
  %v1724 = vunpack.c.l.b16 %v1596
  %v1725 = vunpack.c.l.b16 %v1597
  %v1726 = vunpack.c.l.b16 %v1598
  %v1727 = vunpack.c.l.b16 %v1599
  %v1728 = vunpack.c.l.b16 %v1600
  %v1729 = vunpack.c.l.b16 %v1601
  %v1730 = vunpack.c.l.b16 %v1602
  %v1731 = vunpack.c.l.b16 %v1603
  %v1732 = vunpack.c.l.b16 %v1604
  %v1733 = vunpack.c.l.b16 %v1605
  %v1734 = vunpack.c.l.b16 %v1606
  %v1735 = vunpack.c.l.b16 %v1607
  %v1736 = vunpack.c.l.b16 %v1608
  %v1737 = vunpack.c.l.b16 %v1609
  %v1738 = vunpack.c.l.b16 %v1610
  %v1739 = vunpack.c.l.b16 %v1611
  %v1740 = vunpack.c.l.b16 %v1612
  %v1741 = vunpack.c.l.b16 %v1613
  %v1742 = vunpack.c.l.b16 %v1614
  %v1743 = vunpack.c.l.b16 %v1615
  %v1744 = vunpack.c.l.b16 %v1616
  %v1745 = vunpack.c.l.b16 %v1617
  %v1746 = vunpack.c.l.b16 %v1618
  %v1747 = vunpack.c.l.b16 %v1619
  %v1748 = vunpack.c.l.b16 %v1620
  %v1749 = vunpack.c.l.b16 %v1621
  %v1750 = vunpack.c.l.b16 %v1622
  %v1751 = vunpack.c.l.b16 %v1623
  %v1752 = vunpack.c.l.b16 %v1624
  %v1753 = vunpack.c.l.b16 %v1625
  %v1754 = vunpack.c.l.b16 %v1626
  %v1755 = vunpack.c.l.b16 %v1627
  %v1756 = vunpack.c.l.b16 %v1628
  %v1757 = vunpack.c.l.b16 %v1629
  %v1758 = vunpack.c.l.b16 %v1630
  %v1759 = vunpack.c.l.b16 %v1631
  %v1760 = vpack.c.b16 %v1697, %v1696
  %v1761 = vpack.c.b16 %v1699, %v1698
  %v1762 = vpack.c.b16 %v1701, %v1700
  %v1763 = vpack.c.b16 %v1703, %v1702
  %v1764 = vpack.c.b16 %v1705, %v1704
  %v1765 = vpack.c.b16 %v1707, %v1706
  %v1766 = vpack.c.b16 %v1709, %v1708
  %v1767 = vpack.c.b16 %v1711, %v1710
  %v1768 = vpack.c.b16 %v1713, %v1712
  %v1769 = vpack.c.b16 %v1715, %v1714
  %v1770 = vpack.c.b16 %v1717, %v1716
  %v1771 = vpack.c.b16 %v1719, %v1718
  %v1772 = vpack.c.b16 %v1721, %v1720
  %v1773 = vpack.c.b16 %v1723, %v1722
  %v1774 = vpack.c.b16 %v1725, %v1724
  %v1775 = vpack.c.b16 %v1727, %v1726
  %v1776 = vpack.c.b16 %v1729, %v1728
  %v1777 = vpack.c.b16 %v1731, %v1730
  %v1778 = vpack.c.b16 %v1733, %v1732
  %v1779 = vpack.c.b16 %v1735, %v1734
  %v1780 = vpack.c.b16 %v1737, %v1736
  %v1781 = vpack.c.b16 %v1739, %v1738
  %v1782 = vpack.c.b16 %v1741, %v1740
  %v1783 = vpack.c.b16 %v1743, %v1742
  %v1784 = vpack.c.b16 %v1745, %v1744
  %v1785 = vpack.c.b16 %v1747, %v1746
  %v1786 = vpack.c.b16 %v1749, %v1748
  %v1787 = vpack.c.b16 %v1751, %v1750
  %v1788 = vpack.c.b16 %v1753, %v1752
  %v1789 = vpack.c.b16 %v1755, %v1754
  %v1790 = vpack.c.b16 %v1757, %v1756
  %v1791 = vpack.c.b16 %v1759, %v1758
  %1824 = vmatprep.subr.bf16.mxu0 0
  %1825 = vmatpush1.bf16.msra.mxu0 %v1760
  %1826 = vmatprep.subr.bf16.mxu0 0
  %1827 = vmatpush1.bf16.msra.mxu0 %v1761
  %1828 = vmatprep.subr.bf16.mxu0 0
  %1829 = vmatpush1.bf16.msra.mxu0 %v1762
  %1830 = vmatprep.subr.bf16.mxu0 0
  %1831 = vmatpush1.bf16.msra.mxu0 %v1763
  %1832 = vmatprep.subr.bf16.mxu0 0
  %1833 = vmatpush1.bf16.msra.mxu0 %v1764
  %1834 = vmatprep.subr.bf16.mxu0 0
  %1835 = vmatpush1.bf16.msra.mxu0 %v1765
  %1836 = vmatprep.subr.bf16.mxu0 0
  %1837 = vmatpush1.bf16.msra.mxu0 %v1766
  %1838 = vmatprep.subr.bf16.mxu0 0
  %1839 = vmatpush1.bf16.msra.mxu0 %v1767
  %1840 = vmatprep.subr.bf16.mxu0 0
  %1841 = vmatpush1.bf16.msra.mxu0 %v1768
  %1842 = vmatprep.subr.bf16.mxu0 0
  %1843 = vmatpush1.bf16.msra.mxu0 %v1769
  %1844 = vmatprep.subr.bf16.mxu0 0
  %1845 = vmatpush1.bf16.msra.mxu0 %v1770
  %1846 = vmatprep.subr.bf16.mxu0 0
  %1847 = vmatpush1.bf16.msra.mxu0 %v1771
  %1848 = vmatprep.subr.bf16.mxu0 0
  %1849 = vmatpush1.bf16.msra.mxu0 %v1772
  %1850 = vmatprep.subr.bf16.mxu0 0
  %1851 = vmatpush1.bf16.msra.mxu0 %v1773
  %1852 = vmatprep.subr.bf16.mxu0 0
  %1853 = vmatpush1.bf16.msra.mxu0 %v1774
  %1854 = vmatprep.subr.bf16.mxu0 0
  %1855 = vmatpush1.bf16.msra.mxu0 %v1775
  %1856 = vmatprep.mubr.bf16.mxu0 %v217
  %1857 = vmatmul.mubr.bf16.gmra.mrb[0].mxu0 %v216
  %v1858 = vpop.f32.mrb[0].mxu0
  %v1859 = vadd.f32 0.0, %v1858
  %v1860 = vpop.f32.mrb[0].mxu0
  %v1861 = vpop.f32.mrb[0].mxu0
  %v1862 = vpop.f32.mrb[0].mxu0
  %1863 = vdwg.mxu0
  %1864 = vmatprep.subr.bf16.mxu0 0
  %1865 = vmatpush1.bf16.msra.mxu0 %v1776
  %1866 = vmatprep.subr.bf16.mxu0 0
  %1867 = vmatpush1.bf16.msra.mxu0 %v1777
  %1868 = vmatprep.subr.bf16.mxu0 0
  %1869 = vmatpush1.bf16.msra.mxu0 %v1778
  %1870 = vmatprep.subr.bf16.mxu0 0
  %1871 = vmatpush1.bf16.msra.mxu0 %v1779
  %1872 = vmatprep.subr.bf16.mxu0 0
  %1873 = vmatpush1.bf16.msra.mxu0 %v1780
  %1874 = vmatprep.subr.bf16.mxu0 0
  %1875 = vmatpush1.bf16.msra.mxu0 %v1781
  %1876 = vmatprep.subr.bf16.mxu0 0
  %1877 = vmatpush1.bf16.msra.mxu0 %v1782
  %1878 = vmatprep.subr.bf16.mxu0 0
  %1879 = vmatpush1.bf16.msra.mxu0 %v1783
  %1880 = vmatprep.subr.bf16.mxu0 0
  %1881 = vmatpush1.bf16.msra.mxu0 %v1784
  %1882 = vmatprep.subr.bf16.mxu0 0
  %1883 = vmatpush1.bf16.msra.mxu0 %v1785
  %1884 = vmatprep.subr.bf16.mxu0 0
  %1885 = vmatpush1.bf16.msra.mxu0 %v1786
  %1886 = vmatprep.subr.bf16.mxu0 0
  %1887 = vmatpush1.bf16.msra.mxu0 %v1787
  %1888 = vmatprep.subr.bf16.mxu0 0
  %1889 = vmatpush1.bf16.msra.mxu0 %v1788
  %1890 = vmatprep.subr.bf16.mxu0 0
  %1891 = vmatpush1.bf16.msra.mxu0 %v1789
  %1892 = vmatprep.subr.bf16.mxu0 0
  %1893 = vmatpush1.bf16.msra.mxu0 %v1790
  %1894 = vmatprep.subr.bf16.mxu0 0
  %1895 = vmatpush1.bf16.msra.mxu0 %v1791
  %1896 = vmatprep.mubr.bf16.mxu0 %v219
  %1897 = vmatmul.mubr.bf16.gmra.mrb[0].mxu0 %v218
  %v1898 = vpop.f32.mrb[0].mxu0
  %v1899 = vadd.f32 %v1859, %v1898
  %v1900 = vpop.f32.mrb[0].mxu0
  %v1901 = vpop.f32.mrb[0].mxu0
  %v1902 = vpop.f32.mrb[0].mxu0
  %1903 = vdwg.mxu0
  %s1904 = scalar_lea.vmem %s3, 1280
  %v1905 = vld [vmem:[%s1904] sm:$0xf]
  %v1906 = vld [vmem:[%s1904 + $0x4] sm:$0xf]
  %v1907 = vld [vmem:[%s1904 + $0x8] sm:$0xf]
  %v1908 = vld [vmem:[%s1904 + $0xc] sm:$0xf]
  %v1909 = vld [vmem:[%s1904 + $0x10] sm:$0xf]
  %v1910 = vld [vmem:[%s1904 + $0x14] sm:$0xf]
  %v1911 = vld [vmem:[%s1904 + $0x18] sm:$0xf]
  %v1912 = vld [vmem:[%s1904 + $0x1c] sm:$0xf]
  %v1913 = vld [vmem:[%s1904 + $0x20] sm:$0xf]
  %v1914 = vld [vmem:[%s1904 + $0x24] sm:$0xf]
  %v1915 = vld [vmem:[%s1904 + $0x28] sm:$0xf]
  %v1916 = vld [vmem:[%s1904 + $0x2c] sm:$0xf]
  %v1917 = vld [vmem:[%s1904 + $0x30] sm:$0xf]
  %v1918 = vld [vmem:[%s1904 + $0x34] sm:$0xf]
  %v1919 = vld [vmem:[%s1904 + $0x38] sm:$0xf]
  %v1920 = vld [vmem:[%s1904 + $0x3c] sm:$0xf]
  %v1921 = vld [vmem:[%s1904 + $0x40] sm:$0xf]
  %v1922 = vld [vmem:[%s1904 + $0x44] sm:$0xf]
  %v1923 = vld [vmem:[%s1904 + $0x48] sm:$0xf]
  %v1924 = vld [vmem:[%s1904 + $0x4c] sm:$0xf]
  %v1925 = vld [vmem:[%s1904 + $0x50] sm:$0xf]
  %v1926 = vld [vmem:[%s1904 + $0x54] sm:$0xf]
  %v1927 = vld [vmem:[%s1904 + $0x58] sm:$0xf]
  %v1928 = vld [vmem:[%s1904 + $0x5c] sm:$0xf]
  %v1929 = vld [vmem:[%s1904 + $0x60] sm:$0xf]
  %v1930 = vld [vmem:[%s1904 + $0x64] sm:$0xf]
  %v1931 = vld [vmem:[%s1904 + $0x68] sm:$0xf]
  %v1932 = vld [vmem:[%s1904 + $0x6c] sm:$0xf]
  %v1933 = vld [vmem:[%s1904 + $0x70] sm:$0xf]
  %v1934 = vld [vmem:[%s1904 + $0x74] sm:$0xf]
  %v1935 = vld [vmem:[%s1904 + $0x78] sm:$0xf]
  %v1936 = vld [vmem:[%s1904 + $0x7c] sm:$0xf]
  %v1937 = vld [vmem:[%s1904 + $0x80] sm:$0xf]
  %v1938 = vld [vmem:[%s1904 + $0x84] sm:$0xf]
  %v1939 = vld [vmem:[%s1904 + $0x88] sm:$0xf]
  %v1940 = vld [vmem:[%s1904 + $0x8c] sm:$0xf]
  %v1941 = vld [vmem:[%s1904 + $0x90] sm:$0xf]
  %v1942 = vld [vmem:[%s1904 + $0x94] sm:$0xf]
  %v1943 = vld [vmem:[%s1904 + $0x98] sm:$0xf]
  %v1944 = vld [vmem:[%s1904 + $0x9c] sm:$0xf]
  %v1945 = vld [vmem:[%s1904 + $0xa0] sm:$0xf]
  %v1946 = vld [vmem:[%s1904 + $0xa4] sm:$0xf]
  %v1947 = vld [vmem:[%s1904 + $0xa8] sm:$0xf]
  %v1948 = vld [vmem:[%s1904 + $0xac] sm:$0xf]
  %v1949 = vld [vmem:[%s1904 + $0xb0] sm:$0xf]
  %v1950 = vld [vmem:[%s1904 + $0xb4] sm:$0xf]
  %v1951 = vld [vmem:[%s1904 + $0xb8] sm:$0xf]
  %v1952 = vld [vmem:[%s1904 + $0xbc] sm:$0xf]
  %v1953 = vld [vmem:[%s1904 + $0xc0] sm:$0xf]
  %v1954 = vld [vmem:[%s1904 + $0xc4] sm:$0xf]
  %v1955 = vld [vmem:[%s1904 + $0xc8] sm:$0xf]
  %v1956 = vld [vmem:[%s1904 + $0xcc] sm:$0xf]
  %v1957 = vld [vmem:[%s1904 + $0xd0] sm:$0xf]
  %v1958 = vld [vmem:[%s1904 + $0xd4] sm:$0xf]
  %v1959 = vld [vmem:[%s1904 + $0xd8] sm:$0xf]
  %v1960 = vld [vmem:[%s1904 + $0xdc] sm:$0xf]
  %v1961 = vld [vmem:[%s1904 + $0xe0] sm:$0xf]
  %v1962 = vld [vmem:[%s1904 + $0xe4] sm:$0xf]
  %v1963 = vld [vmem:[%s1904 + $0xe8] sm:$0xf]
  %v1964 = vld [vmem:[%s1904 + $0xec] sm:$0xf]
  %v1965 = vld [vmem:[%s1904 + $0xf0] sm:$0xf]
  %v1966 = vld [vmem:[%s1904 + $0xf4] sm:$0xf]
  %v1967 = vld [vmem:[%s1904 + $0xf8] sm:$0xf]
  %v1968 = vld [vmem:[%s1904 + $0xfc] sm:$0xf]
  %v2033 = vunpack.c.l.b16 %v1905
  %v2034 = vunpack.c.l.b16 %v1906
  %v2035 = vunpack.c.l.b16 %v1907
  %v2036 = vunpack.c.l.b16 %v1908
  %v2037 = vunpack.c.l.b16 %v1909
  %v2038 = vunpack.c.l.b16 %v1910
  %v2039 = vunpack.c.l.b16 %v1911
  %v2040 = vunpack.c.l.b16 %v1912
  %v2041 = vunpack.c.l.b16 %v1913
  %v2042 = vunpack.c.l.b16 %v1914
  %v2043 = vunpack.c.l.b16 %v1915
  %v2044 = vunpack.c.l.b16 %v1916
  %v2045 = vunpack.c.l.b16 %v1917
  %v2046 = vunpack.c.l.b16 %v1918
  %v2047 = vunpack.c.l.b16 %v1919
  %v2048 = vunpack.c.l.b16 %v1920
  %v2049 = vunpack.c.l.b16 %v1921
  %v2050 = vunpack.c.l.b16 %v1922
  %v2051 = vunpack.c.l.b16 %v1923
  %v2052 = vunpack.c.l.b16 %v1924
  %v2053 = vunpack.c.l.b16 %v1925
  %v2054 = vunpack.c.l.b16 %v1926
  %v2055 = vunpack.c.l.b16 %v1927
  %v2056 = vunpack.c.l.b16 %v1928
  %v2057 = vunpack.c.l.b16 %v1929
  %v2058 = vunpack.c.l.b16 %v1930
  %v2059 = vunpack.c.l.b16 %v1931
  %v2060 = vunpack.c.l.b16 %v1932
  %v2061 = vunpack.c.l.b16 %v1933
  %v2062 = vunpack.c.l.b16 %v1934
  %v2063 = vunpack.c.l.b16 %v1935
  %v2064 = vunpack.c.l.b16 %v1936
  %v2065 = vunpack.c.l.b16 %v1937
  %v2066 = vunpack.c.l.b16 %v1938
  %v2067 = vunpack.c.l.b16 %v1939
  %v2068 = vunpack.c.l.b16 %v1940
  %v2069 = vunpack.c.l.b16 %v1941
  %v2070 = vunpack.c.l.b16 %v1942
  %v2071 = vunpack.c.l.b16 %v1943
  %v2072 = vunpack.c.l.b16 %v1944
  %v2073 = vunpack.c.l.b16 %v1945
  %v2074 = vunpack.c.l.b16 %v1946
  %v2075 = vunpack.c.l.b16 %v1947
  %v2076 = vunpack.c.l.b16 %v1948
  %v2077 = vunpack.c.l.b16 %v1949
  %v2078 = vunpack.c.l.b16 %v1950
  %v2079 = vunpack.c.l.b16 %v1951
  %v2080 = vunpack.c.l.b16 %v1952
  %v2081 = vunpack.c.l.b16 %v1953
  %v2082 = vunpack.c.l.b16 %v1954
  %v2083 = vunpack.c.l.b16 %v1955
  %v2084 = vunpack.c.l.b16 %v1956
  %v2085 = vunpack.c.l.b16 %v1957
  %v2086 = vunpack.c.l.b16 %v1958
  %v2087 = vunpack.c.l.b16 %v1959
  %v2088 = vunpack.c.l.b16 %v1960
  %v2089 = vunpack.c.l.b16 %v1961
  %v2090 = vunpack.c.l.b16 %v1962
  %v2091 = vunpack.c.l.b16 %v1963
  %v2092 = vunpack.c.l.b16 %v1964
  %v2093 = vunpack.c.l.b16 %v1965
  %v2094 = vunpack.c.l.b16 %v1966
  %v2095 = vunpack.c.l.b16 %v1967
  %v2096 = vunpack.c.l.b16 %v1968
  %v2097 = vpack.c.b16 %v2034, %v2033
  %v2098 = vpack.c.b16 %v2036, %v2035
  %v2099 = vpack.c.b16 %v2038, %v2037
  %v2100 = vpack.c.b16 %v2040, %v2039
  %v2101 = vpack.c.b16 %v2042, %v2041
  %v2102 = vpack.c.b16 %v2044, %v2043
  %v2103 = vpack.c.b16 %v2046, %v2045
  %v2104 = vpack.c.b16 %v2048, %v2047
  %v2105 = vpack.c.b16 %v2050, %v2049
  %v2106 = vpack.c.b16 %v2052, %v2051
  %v2107 = vpack.c.b16 %v2054, %v2053
  %v2108 = vpack.c.b16 %v2056, %v2055
  %v2109 = vpack.c.b16 %v2058, %v2057
  %v2110 = vpack.c.b16 %v2060, %v2059
  %v2111 = vpack.c.b16 %v2062, %v2061
  %v2112 = vpack.c.b16 %v2064, %v2063
  %v2113 = vpack.c.b16 %v2066, %v2065
  %v2114 = vpack.c.b16 %v2068, %v2067
  %v2115 = vpack.c.b16 %v2070, %v2069
  %v2116 = vpack.c.b16 %v2072, %v2071
  %v2117 = vpack.c.b16 %v2074, %v2073
  %v2118 = vpack.c.b16 %v2076, %v2075
  %v2119 = vpack.c.b16 %v2078, %v2077
  %v2120 = vpack.c.b16 %v2080, %v2079
  %v2121 = vpack.c.b16 %v2082, %v2081
  %v2122 = vpack.c.b16 %v2084, %v2083
  %v2123 = vpack.c.b16 %v2086, %v2085
  %v2124 = vpack.c.b16 %v2088, %v2087
  %v2125 = vpack.c.b16 %v2090, %v2089
  %v2126 = vpack.c.b16 %v2092, %v2091
  %v2127 = vpack.c.b16 %v2094, %v2093
  %v2128 = vpack.c.b16 %v2096, %v2095
  %2161 = vmatprep.subr.bf16.mxu0 0
  %2162 = vmatpush1.bf16.msra.mxu0 %v2097
  %2163 = vmatprep.subr.bf16.mxu0 0
  %2164 = vmatpush1.bf16.msra.mxu0 %v2098
  %2165 = vmatprep.subr.bf16.mxu0 0
  %2166 = vmatpush1.bf16.msra.mxu0 %v2099
  %2167 = vmatprep.subr.bf16.mxu0 0
  %2168 = vmatpush1.bf16.msra.mxu0 %v2100
  %2169 = vmatprep.subr.bf16.mxu0 0
  %2170 = vmatpush1.bf16.msra.mxu0 %v2101
  %2171 = vmatprep.subr.bf16.mxu0 0
  %2172 = vmatpush1.bf16.msra.mxu0 %v2102
  %2173 = vmatprep.subr.bf16.mxu0 0
  %2174 = vmatpush1.bf16.msra.mxu0 %v2103
  %2175 = vmatprep.subr.bf16.mxu0 0
  %2176 = vmatpush1.bf16.msra.mxu0 %v2104
  %2177 = vmatprep.subr.bf16.mxu0 0
  %2178 = vmatpush1.bf16.msra.mxu0 %v2105
  %2179 = vmatprep.subr.bf16.mxu0 0
  %2180 = vmatpush1.bf16.msra.mxu0 %v2106
  %2181 = vmatprep.subr.bf16.mxu0 0
  %2182 = vmatpush1.bf16.msra.mxu0 %v2107
  %2183 = vmatprep.subr.bf16.mxu0 0
  %2184 = vmatpush1.bf16.msra.mxu0 %v2108
  %2185 = vmatprep.subr.bf16.mxu0 0
  %2186 = vmatpush1.bf16.msra.mxu0 %v2109
  %2187 = vmatprep.subr.bf16.mxu0 0
  %2188 = vmatpush1.bf16.msra.mxu0 %v2110
  %2189 = vmatprep.subr.bf16.mxu0 0
  %2190 = vmatpush1.bf16.msra.mxu0 %v2111
  %2191 = vmatprep.subr.bf16.mxu0 0
  %2192 = vmatpush1.bf16.msra.mxu0 %v2112
  %2193 = vmatprep.mubr.bf16.mxu0 %v217
  %2194 = vmatmul.mubr.bf16.gmra.mrb[0].mxu0 %v216
  %v2195 = vpop.f32.mrb[0].mxu0
  %v2196 = vadd.f32 0.0, %v2195
  %v2197 = vpop.f32.mrb[0].mxu0
  %v2198 = vpop.f32.mrb[0].mxu0
  %v2199 = vpop.f32.mrb[0].mxu0
  %2200 = vdwg.mxu0
  %2201 = vmatprep.subr.bf16.mxu0 0
  %2202 = vmatpush1.bf16.msra.mxu0 %v2113
  %2203 = vmatprep.subr.bf16.mxu0 0
  %2204 = vmatpush1.bf16.msra.mxu0 %v2114
  %2205 = vmatprep.subr.bf16.mxu0 0
  %2206 = vmatpush1.bf16.msra.mxu0 %v2115
  %2207 = vmatprep.subr.bf16.mxu0 0
  %2208 = vmatpush1.bf16.msra.mxu0 %v2116
  %2209 = vmatprep.subr.bf16.mxu0 0
  %2210 = vmatpush1.bf16.msra.mxu0 %v2117
  %2211 = vmatprep.subr.bf16.mxu0 0
  %2212 = vmatpush1.bf16.msra.mxu0 %v2118
  %2213 = vmatprep.subr.bf16.mxu0 0
  %2214 = vmatpush1.bf16.msra.mxu0 %v2119
  %2215 = vmatprep.subr.bf16.mxu0 0
  %2216 = vmatpush1.bf16.msra.mxu0 %v2120
  %2217 = vmatprep.subr.bf16.mxu0 0
  %2218 = vmatpush1.bf16.msra.mxu0 %v2121
  %2219 = vmatprep.subr.bf16.mxu0 0
  %2220 = vmatpush1.bf16.msra.mxu0 %v2122
  %2221 = vmatprep.subr.bf16.mxu0 0
  %2222 = vmatpush1.bf16.msra.mxu0 %v2123
  %2223 = vmatprep.subr.bf16.mxu0 0
  %2224 = vmatpush1.bf16.msra.mxu0 %v2124
  %2225 = vmatprep.subr.bf16.mxu0 0
  %2226 = vmatpush1.bf16.msra.mxu0 %v2125
  %2227 = vmatprep.subr.bf16.mxu0 0
  %2228 = vmatpush1.bf16.msra.mxu0 %v2126
  %2229 = vmatprep.subr.bf16.mxu0 0
  %2230 = vmatpush1.bf16.msra.mxu0 %v2127
  %2231 = vmatprep.subr.bf16.mxu0 0
  %2232 = vmatpush1.bf16.msra.mxu0 %v2128
  %2233 = vmatprep.mubr.bf16.mxu0 %v219
  %2234 = vmatmul.mubr.bf16.gmra.mrb[0].mxu0 %v218
  %v2235 = vpop.f32.mrb[0].mxu0
  %v2236 = vadd.f32 %v2196, %v2235
  %v2237 = vpop.f32.mrb[0].mxu0
  %v2238 = vpop.f32.mrb[0].mxu0
  %v2239 = vpop.f32.mrb[0].mxu0
  %2240 = vdwg.mxu0
  %s2241 = scalar_lea.vmem %s3, 1536
  %v2242 = vld [vmem:[%s2241] sm:$0xf]
  %v2243 = vld [vmem:[%s2241 + $0x4] sm:$0xf]
  %v2244 = vld [vmem:[%s2241 + $0x8] sm:$0xf]
  %v2245 = vld [vmem:[%s2241 + $0xc] sm:$0xf]
  %v2246 = vld [vmem:[%s2241 + $0x10] sm:$0xf]
  %v2247 = vld [vmem:[%s2241 + $0x14] sm:$0xf]
  %v2248 = vld [vmem:[%s2241 + $0x18] sm:$0xf]
  %v2249 = vld [vmem:[%s2241 + $0x1c] sm:$0xf]
  %v2250 = vld [vmem:[%s2241 + $0x20] sm:$0xf]
  %v2251 = vld [vmem:[%s2241 + $0x24] sm:$0xf]
  %v2252 = vld [vmem:[%s2241 + $0x28] sm:$0xf]
  %v2253 = vld [vmem:[%s2241 + $0x2c] sm:$0xf]
  %v2254 = vld [vmem:[%s2241 + $0x30] sm:$0xf]
  %v2255 = vld [vmem:[%s2241 + $0x34] sm:$0xf]
  %v2256 = vld [vmem:[%s2241 + $0x38] sm:$0xf]
  %v2257 = vld [vmem:[%s2241 + $0x3c] sm:$0xf]
  %v2258 = vld [vmem:[%s2241 + $0x40] sm:$0xf]
  %v2259 = vld [vmem:[%s2241 + $0x44] sm:$0xf]
  %v2260 = vld [vmem:[%s2241 + $0x48] sm:$0xf]
  %v2261 = vld [vmem:[%s2241 + $0x4c] sm:$0xf]
  %v2262 = vld [vmem:[%s2241 + $0x50] sm:$0xf]
  %v2263 = vld [vmem:[%s2241 + $0x54] sm:$0xf]
  %v2264 = vld [vmem:[%s2241 + $0x58] sm:$0xf]
  %v2265 = vld [vmem:[%s2241 + $0x5c] sm:$0xf]
  %v2266 = vld [vmem:[%s2241 + $0x60] sm:$0xf]
  %v2267 = vld [vmem:[%s2241 + $0x64] sm:$0xf]
  %v2268 = vld [vmem:[%s2241 + $0x68] sm:$0xf]
  %v2269 = vld [vmem:[%s2241 + $0x6c] sm:$0xf]
  %v2270 = vld [vmem:[%s2241 + $0x70] sm:$0xf]
  %v2271 = vld [vmem:[%s2241 + $0x74] sm:$0xf]
  %v2272 = vld [vmem:[%s2241 + $0x78] sm:$0xf]
  %v2273 = vld [vmem:[%s2241 + $0x7c] sm:$0xf]
  %v2274 = vld [vmem:[%s2241 + $0x80] sm:$0xf]
  %v2275 = vld [vmem:[%s2241 + $0x84] sm:$0xf]
  %v2276 = vld [vmem:[%s2241 + $0x88] sm:$0xf]
  %v2277 = vld [vmem:[%s2241 + $0x8c] sm:$0xf]
  %v2278 = vld [vmem:[%s2241 + $0x90] sm:$0xf]
  %v2279 = vld [vmem:[%s2241 + $0x94] sm:$0xf]
  %v2280 = vld [vmem:[%s2241 + $0x98] sm:$0xf]
  %v2281 = vld [vmem:[%s2241 + $0x9c] sm:$0xf]
  %v2282 = vld [vmem:[%s2241 + $0xa0] sm:$0xf]
  %v2283 = vld [vmem:[%s2241 + $0xa4] sm:$0xf]
  %v2284 = vld [vmem:[%s2241 + $0xa8] sm:$0xf]
  %v2285 = vld [vmem:[%s2241 + $0xac] sm:$0xf]
  %v2286 = vld [vmem:[%s2241 + $0xb0] sm:$0xf]
  %v2287 = vld [vmem:[%s2241 + $0xb4] sm:$0xf]
  %v2288 = vld [vmem:[%s2241 + $0xb8] sm:$0xf]
  %v2289 = vld [vmem:[%s2241 + $0xbc] sm:$0xf]
  %v2290 = vld [vmem:[%s2241 + $0xc0] sm:$0xf]
  %v2291 = vld [vmem:[%s2241 + $0xc4] sm:$0xf]
  %v2292 = vld [vmem:[%s2241 + $0xc8] sm:$0xf]
  %v2293 = vld [vmem:[%s2241 + $0xcc] sm:$0xf]
  %v2294 = vld [vmem:[%s2241 + $0xd0] sm:$0xf]
  %v2295 = vld [vmem:[%s2241 + $0xd4] sm:$0xf]
  %v2296 = vld [vmem:[%s2241 + $0xd8] sm:$0xf]
  %v2297 = vld [vmem:[%s2241 + $0xdc] sm:$0xf]
  %v2298 = vld [vmem:[%s2241 + $0xe0] sm:$0xf]
  %v2299 = vld [vmem:[%s2241 + $0xe4] sm:$0xf]
  %v2300 = vld [vmem:[%s2241 + $0xe8] sm:$0xf]
  %v2301 = vld [vmem:[%s2241 + $0xec] sm:$0xf]
  %v2302 = vld [vmem:[%s2241 + $0xf0] sm:$0xf]
  %v2303 = vld [vmem:[%s2241 + $0xf4] sm:$0xf]
  %v2304 = vld [vmem:[%s2241 + $0xf8] sm:$0xf]
  %v2305 = vld [vmem:[%s2241 + $0xfc] sm:$0xf]
  %v2370 = vunpack.c.l.b16 %v2242
  %v2371 = vunpack.c.l.b16 %v2243
  %v2372 = vunpack.c.l.b16 %v2244
  %v2373 = vunpack.c.l.b16 %v2245
  %v2374 = vunpack.c.l.b16 %v2246
  %v2375 = vunpack.c.l.b16 %v2247
  %v2376 = vunpack.c.l.b16 %v2248
  %v2377 = vunpack.c.l.b16 %v2249
  %v2378 = vunpack.c.l.b16 %v2250
  %v2379 = vunpack.c.l.b16 %v2251
  %v2380 = vunpack.c.l.b16 %v2252
  %v2381 = vunpack.c.l.b16 %v2253
  %v2382 = vunpack.c.l.b16 %v2254
  %v2383 = vunpack.c.l.b16 %v2255
  %v2384 = vunpack.c.l.b16 %v2256
  %v2385 = vunpack.c.l.b16 %v2257
  %v2386 = vunpack.c.l.b16 %v2258
  %v2387 = vunpack.c.l.b16 %v2259
  %v2388 = vunpack.c.l.b16 %v2260
  %v2389 = vunpack.c.l.b16 %v2261
  %v2390 = vunpack.c.l.b16 %v2262
  %v2391 = vunpack.c.l.b16 %v2263
  %v2392 = vunpack.c.l.b16 %v2264
  %v2393 = vunpack.c.l.b16 %v2265
  %v2394 = vunpack.c.l.b16 %v2266
  %v2395 = vunpack.c.l.b16 %v2267
  %v2396 = vunpack.c.l.b16 %v2268
  %v2397 = vunpack.c.l.b16 %v2269
  %v2398 = vunpack.c.l.b16 %v2270
  %v2399 = vunpack.c.l.b16 %v2271
  %v2400 = vunpack.c.l.b16 %v2272
  %v2401 = vunpack.c.l.b16 %v2273
  %v2402 = vunpack.c.l.b16 %v2274
  %v2403 = vunpack.c.l.b16 %v2275
  %v2404 = vunpack.c.l.b16 %v2276
  %v2405 = vunpack.c.l.b16 %v2277
  %v2406 = vunpack.c.l.b16 %v2278
  %v2407 = vunpack.c.l.b16 %v2279
  %v2408 = vunpack.c.l.b16 %v2280
  %v2409 = vunpack.c.l.b16 %v2281
  %v2410 = vunpack.c.l.b16 %v2282
  %v2411 = vunpack.c.l.b16 %v2283
  %v2412 = vunpack.c.l.b16 %v2284
  %v2413 = vunpack.c.l.b16 %v2285
  %v2414 = vunpack.c.l.b16 %v2286
  %v2415 = vunpack.c.l.b16 %v2287
  %v2416 = vunpack.c.l.b16 %v2288
  %v2417 = vunpack.c.l.b16 %v2289
  %v2418 = vunpack.c.l.b16 %v2290
  %v2419 = vunpack.c.l.b16 %v2291
  %v2420 = vunpack.c.l.b16 %v2292
  %v2421 = vunpack.c.l.b16 %v2293
  %v2422 = vunpack.c.l.b16 %v2294
  %v2423 = vunpack.c.l.b16 %v2295
  %v2424 = vunpack.c.l.b16 %v2296
  %v2425 = vunpack.c.l.b16 %v2297
  %v2426 = vunpack.c.l.b16 %v2298
  %v2427 = vunpack.c.l.b16 %v2299
  %v2428 = vunpack.c.l.b16 %v2300
  %v2429 = vunpack.c.l.b16 %v2301
  %v2430 = vunpack.c.l.b16 %v2302
  %v2431 = vunpack.c.l.b16 %v2303
  %v2432 = vunpack.c.l.b16 %v2304
  %v2433 = vunpack.c.l.b16 %v2305
  %v2434 = vpack.c.b16 %v2371, %v2370
  %v2435 = vpack.c.b16 %v2373, %v2372
  %v2436 = vpack.c.b16 %v2375, %v2374
  %v2437 = vpack.c.b16 %v2377, %v2376
  %v2438 = vpack.c.b16 %v2379, %v2378
  %v2439 = vpack.c.b16 %v2381, %v2380
  %v2440 = vpack.c.b16 %v2383, %v2382
  %v2441 = vpack.c.b16 %v2385, %v2384
  %v2442 = vpack.c.b16 %v2387, %v2386
  %v2443 = vpack.c.b16 %v2389, %v2388
  %v2444 = vpack.c.b16 %v2391, %v2390
  %v2445 = vpack.c.b16 %v2393, %v2392
  %v2446 = vpack.c.b16 %v2395, %v2394
  %v2447 = vpack.c.b16 %v2397, %v2396
  %v2448 = vpack.c.b16 %v2399, %v2398
  %v2449 = vpack.c.b16 %v2401, %v2400
  %v2450 = vpack.c.b16 %v2403, %v2402
  %v2451 = vpack.c.b16 %v2405, %v2404
  %v2452 = vpack.c.b16 %v2407, %v2406
  %v2453 = vpack.c.b16 %v2409, %v2408
  %v2454 = vpack.c.b16 %v2411, %v2410
  %v2455 = vpack.c.b16 %v2413, %v2412
  %v2456 = vpack.c.b16 %v2415, %v2414
  %v2457 = vpack.c.b16 %v2417, %v2416
  %v2458 = vpack.c.b16 %v2419, %v2418
  %v2459 = vpack.c.b16 %v2421, %v2420
  %v2460 = vpack.c.b16 %v2423, %v2422
  %v2461 = vpack.c.b16 %v2425, %v2424
  %v2462 = vpack.c.b16 %v2427, %v2426
  %v2463 = vpack.c.b16 %v2429, %v2428
  %v2464 = vpack.c.b16 %v2431, %v2430
  %v2465 = vpack.c.b16 %v2433, %v2432
  %2498 = vmatprep.subr.bf16.mxu0 0
  %2499 = vmatpush1.bf16.msra.mxu0 %v2434
  %2500 = vmatprep.subr.bf16.mxu0 0
  %2501 = vmatpush1.bf16.msra.mxu0 %v2435
  %2502 = vmatprep.subr.bf16.mxu0 0
  %2503 = vmatpush1.bf16.msra.mxu0 %v2436
  %2504 = vmatprep.subr.bf16.mxu0 0
  %2505 = vmatpush1.bf16.msra.mxu0 %v2437
  %2506 = vmatprep.subr.bf16.mxu0 0
  %2507 = vmatpush1.bf16.msra.mxu0 %v2438
  %2508 = vmatprep.subr.bf16.mxu0 0
  %2509 = vmatpush1.bf16.msra.mxu0 %v2439
  %2510 = vmatprep.subr.bf16.mxu0 0
  %2511 = vmatpush1.bf16.msra.mxu0 %v2440
  %2512 = vmatprep.subr.bf16.mxu0 0
  %2513 = vmatpush1.bf16.msra.mxu0 %v2441
  %2514 = vmatprep.subr.bf16.mxu0 0
  %2515 = vmatpush1.bf16.msra.mxu0 %v2442
  %2516 = vmatprep.subr.bf16.mxu0 0
  %2517 = vmatpush1.bf16.msra.mxu0 %v2443
  %2518 = vmatprep.subr.bf16.mxu0 0
  %2519 = vmatpush1.bf16.msra.mxu0 %v2444
  %2520 = vmatprep.subr.bf16.mxu0 0
  %2521 = vmatpush1.bf16.msra.mxu0 %v2445
  %2522 = vmatprep.subr.bf16.mxu0 0
  %2523 = vmatpush1.bf16.msra.mxu0 %v2446
  %2524 = vmatprep.subr.bf16.mxu0 0
  %2525 = vmatpush1.bf16.msra.mxu0 %v2447
  %2526 = vmatprep.subr.bf16.mxu0 0
  %2527 = vmatpush1.bf16.msra.mxu0 %v2448
  %2528 = vmatprep.subr.bf16.mxu0 0
  %2529 = vmatpush1.bf16.msra.mxu0 %v2449
  %2530 = vmatprep.mubr.bf16.mxu0 %v217
  %2531 = vmatmul.mubr.bf16.gmra.mrb[0].mxu0 %v216
  %v2532 = vpop.f32.mrb[0].mxu0
  %v2533 = vadd.f32 0.0, %v2532
  %v2534 = vpop.f32.mrb[0].mxu0
  %v2535 = vpop.f32.mrb[0].mxu0
  %v2536 = vpop.f32.mrb[0].mxu0
  %2537 = vdwg.mxu0
  %2538 = vmatprep.subr.bf16.mxu0 0
  %2539 = vmatpush1.bf16.msra.mxu0 %v2450
  %2540 = vmatprep.subr.bf16.mxu0 0
  %2541 = vmatpush1.bf16.msra.mxu0 %v2451
  %2542 = vmatprep.subr.bf16.mxu0 0
  %2543 = vmatpush1.bf16.msra.mxu0 %v2452
  %2544 = vmatprep.subr.bf16.mxu0 0
  %2545 = vmatpush1.bf16.msra.mxu0 %v2453
  %2546 = vmatprep.subr.bf16.mxu0 0
  %2547 = vmatpush1.bf16.msra.mxu0 %v2454
  %2548 = vmatprep.subr.bf16.mxu0 0
  %2549 = vmatpush1.bf16.msra.mxu0 %v2455
  %2550 = vmatprep.subr.bf16.mxu0 0
  %2551 = vmatpush1.bf16.msra.mxu0 %v2456
  %2552 = vmatprep.subr.bf16.mxu0 0
  %2553 = vmatpush1.bf16.msra.mxu0 %v2457
  %2554 = vmatprep.subr.bf16.mxu0 0
  %2555 = vmatpush1.bf16.msra.mxu0 %v2458
  %2556 = vmatprep.subr.bf16.mxu0 0
  %2557 = vmatpush1.bf16.msra.mxu0 %v2459
  %2558 = vmatprep.subr.bf16.mxu0 0
  %2559 = vmatpush1.bf16.msra.mxu0 %v2460
  %2560 = vmatprep.subr.bf16.mxu0 0
  %2561 = vmatpush1.bf16.msra.mxu0 %v2461
  %2562 = vmatprep.subr.bf16.mxu0 0
  %2563 = vmatpush1.bf16.msra.mxu0 %v2462
  %2564 = vmatprep.subr.bf16.mxu0 0
  %2565 = vmatpush1.bf16.msra.mxu0 %v2463
  %2566 = vmatprep.subr.bf16.mxu0 0
  %2567 = vmatpush1.bf16.msra.mxu0 %v2464
  %2568 = vmatprep.subr.bf16.mxu0 0
  %2569 = vmatpush1.bf16.msra.mxu0 %v2465
  %2570 = vmatprep.mubr.bf16.mxu0 %v219
  %2571 = vmatmul.mubr.bf16.gmra.mrb[0].mxu0 %v218
  %v2572 = vpop.f32.mrb[0].mxu0
  %v2573 = vadd.f32 %v2533, %v2572
  %v2574 = vpop.f32.mrb[0].mxu0
  %v2575 = vpop.f32.mrb[0].mxu0
  %v2576 = vpop.f32.mrb[0].mxu0
  %2577 = vdwg.mxu0
  %s2578 = scalar_lea.vmem %s3, 1792
  %v2579 = vld [vmem:[%s2578] sm:$0xf]
  %v2580 = vld [vmem:[%s2578 + $0x4] sm:$0xf]
  %v2581 = vld [vmem:[%s2578 + $0x8] sm:$0xf]
  %v2582 = vld [vmem:[%s2578 + $0xc] sm:$0xf]
  %v2583 = vld [vmem:[%s2578 + $0x10] sm:$0xf]
  %v2584 = vld [vmem:[%s2578 + $0x14] sm:$0xf]
  %v2585 = vld [vmem:[%s2578 + $0x18] sm:$0xf]
  %v2586 = vld [vmem:[%s2578 + $0x1c] sm:$0xf]
  %v2587 = vld [vmem:[%s2578 + $0x20] sm:$0xf]
  %v2588 = vld [vmem:[%s2578 + $0x24] sm:$0xf]
  %v2589 = vld [vmem:[%s2578 + $0x28] sm:$0xf]
  %v2590 = vld [vmem:[%s2578 + $0x2c] sm:$0xf]
  %v2591 = vld [vmem:[%s2578 + $0x30] sm:$0xf]
  %v2592 = vld [vmem:[%s2578 + $0x34] sm:$0xf]
  %v2593 = vld [vmem:[%s2578 + $0x38] sm:$0xf]
  %v2594 = vld [vmem:[%s2578 + $0x3c] sm:$0xf]
  %v2595 = vld [vmem:[%s2578 + $0x40] sm:$0xf]
  %v2596 = vld [vmem:[%s2578 + $0x44] sm:$0xf]
  %v2597 = vld [vmem:[%s2578 + $0x48] sm:$0xf]
  %v2598 = vld [vmem:[%s2578 + $0x4c] sm:$0xf]
  %v2599 = vld [vmem:[%s2578 + $0x50] sm:$0xf]
  %v2600 = vld [vmem:[%s2578 + $0x54] sm:$0xf]
  %v2601 = vld [vmem:[%s2578 + $0x58] sm:$0xf]
  %v2602 = vld [vmem:[%s2578 + $0x5c] sm:$0xf]
  %v2603 = vld [vmem:[%s2578 + $0x60] sm:$0xf]
  %v2604 = vld [vmem:[%s2578 + $0x64] sm:$0xf]
  %v2605 = vld [vmem:[%s2578 + $0x68] sm:$0xf]
  %v2606 = vld [vmem:[%s2578 + $0x6c] sm:$0xf]
  %v2607 = vld [vmem:[%s2578 + $0x70] sm:$0xf]
  %v2608 = vld [vmem:[%s2578 + $0x74] sm:$0xf]
  %v2609 = vld [vmem:[%s2578 + $0x78] sm:$0xf]
  %v2610 = vld [vmem:[%s2578 + $0x7c] sm:$0xf]
  %v2611 = vld [vmem:[%s2578 + $0x80] sm:$0xf]
  %v2612 = vld [vmem:[%s2578 + $0x84] sm:$0xf]
  %v2613 = vld [vmem:[%s2578 + $0x88] sm:$0xf]
  %v2614 = vld [vmem:[%s2578 + $0x8c] sm:$0xf]
  %v2615 = vld [vmem:[%s2578 + $0x90] sm:$0xf]
  %v2616 = vld [vmem:[%s2578 + $0x94] sm:$0xf]
  %v2617 = vld [vmem:[%s2578 + $0x98] sm:$0xf]
  %v2618 = vld [vmem:[%s2578 + $0x9c] sm:$0xf]
  %v2619 = vld [vmem:[%s2578 + $0xa0] sm:$0xf]
  %v2620 = vld [vmem:[%s2578 + $0xa4] sm:$0xf]
  %v2621 = vld [vmem:[%s2578 + $0xa8] sm:$0xf]
  %v2622 = vld [vmem:[%s2578 + $0xac] sm:$0xf]
  %v2623 = vld [vmem:[%s2578 + $0xb0] sm:$0xf]
  %v2624 = vld [vmem:[%s2578 + $0xb4] sm:$0xf]
  %v2625 = vld [vmem:[%s2578 + $0xb8] sm:$0xf]
  %v2626 = vld [vmem:[%s2578 + $0xbc] sm:$0xf]
  %v2627 = vld [vmem:[%s2578 + $0xc0] sm:$0xf]
  %v2628 = vld [vmem:[%s2578 + $0xc4] sm:$0xf]
  %v2629 = vld [vmem:[%s2578 + $0xc8] sm:$0xf]
  %v2630 = vld [vmem:[%s2578 + $0xcc] sm:$0xf]
  %v2631 = vld [vmem:[%s2578 + $0xd0] sm:$0xf]
  %v2632 = vld [vmem:[%s2578 + $0xd4] sm:$0xf]
  %v2633 = vld [vmem:[%s2578 + $0xd8] sm:$0xf]
  %v2634 = vld [vmem:[%s2578 + $0xdc] sm:$0xf]
  %v2635 = vld [vmem:[%s2578 + $0xe0] sm:$0xf]
  %v2636 = vld [vmem:[%s2578 + $0xe4] sm:$0xf]
  %v2637 = vld [vmem:[%s2578 + $0xe8] sm:$0xf]
  %v2638 = vld [vmem:[%s2578 + $0xec] sm:$0xf]
  %v2639 = vld [vmem:[%s2578 + $0xf0] sm:$0xf]
  %v2640 = vld [vmem:[%s2578 + $0xf4] sm:$0xf]
  %v2641 = vld [vmem:[%s2578 + $0xf8] sm:$0xf]
  %v2642 = vld [vmem:[%s2578 + $0xfc] sm:$0xf]
  %v2707 = vunpack.c.l.b16 %v2579
  %v2708 = vunpack.c.l.b16 %v2580
  %v2709 = vunpack.c.l.b16 %v2581
  %v2710 = vunpack.c.l.b16 %v2582
  %v2711 = vunpack.c.l.b16 %v2583
  %v2712 = vunpack.c.l.b16 %v2584
  %v2713 = vunpack.c.l.b16 %v2585
  %v2714 = vunpack.c.l.b16 %v2586
  %v2715 = vunpack.c.l.b16 %v2587
  %v2716 = vunpack.c.l.b16 %v2588
  %v2717 = vunpack.c.l.b16 %v2589
  %v2718 = vunpack.c.l.b16 %v2590
  %v2719 = vunpack.c.l.b16 %v2591
  %v2720 = vunpack.c.l.b16 %v2592
  %v2721 = vunpack.c.l.b16 %v2593
  %v2722 = vunpack.c.l.b16 %v2594
  %v2723 = vunpack.c.l.b16 %v2595
  %v2724 = vunpack.c.l.b16 %v2596
  %v2725 = vunpack.c.l.b16 %v2597
  %v2726 = vunpack.c.l.b16 %v2598
  %v2727 = vunpack.c.l.b16 %v2599
  %v2728 = vunpack.c.l.b16 %v2600
  %v2729 = vunpack.c.l.b16 %v2601
  %v2730 = vunpack.c.l.b16 %v2602
  %v2731 = vunpack.c.l.b16 %v2603
  %v2732 = vunpack.c.l.b16 %v2604
  %v2733 = vunpack.c.l.b16 %v2605
  %v2734 = vunpack.c.l.b16 %v2606
  %v2735 = vunpack.c.l.b16 %v2607
  %v2736 = vunpack.c.l.b16 %v2608
  %v2737 = vunpack.c.l.b16 %v2609
  %v2738 = vunpack.c.l.b16 %v2610
  %v2739 = vunpack.c.l.b16 %v2611
  %v2740 = vunpack.c.l.b16 %v2612
  %v2741 = vunpack.c.l.b16 %v2613
  %v2742 = vunpack.c.l.b16 %v2614
  %v2743 = vunpack.c.l.b16 %v2615
  %v2744 = vunpack.c.l.b16 %v2616
  %v2745 = vunpack.c.l.b16 %v2617
  %v2746 = vunpack.c.l.b16 %v2618
  %v2747 = vunpack.c.l.b16 %v2619
  %v2748 = vunpack.c.l.b16 %v2620
  %v2749 = vunpack.c.l.b16 %v2621
  %v2750 = vunpack.c.l.b16 %v2622
  %v2751 = vunpack.c.l.b16 %v2623
  %v2752 = vunpack.c.l.b16 %v2624
  %v2753 = vunpack.c.l.b16 %v2625
  %v2754 = vunpack.c.l.b16 %v2626
  %v2755 = vunpack.c.l.b16 %v2627
  %v2756 = vunpack.c.l.b16 %v2628
  %v2757 = vunpack.c.l.b16 %v2629
  %v2758 = vunpack.c.l.b16 %v2630
  %v2759 = vunpack.c.l.b16 %v2631
  %v2760 = vunpack.c.l.b16 %v2632
  %v2761 = vunpack.c.l.b16 %v2633
  %v2762 = vunpack.c.l.b16 %v2634
  %v2763 = vunpack.c.l.b16 %v2635
  %v2764 = vunpack.c.l.b16 %v2636
  %v2765 = vunpack.c.l.b16 %v2637
  %v2766 = vunpack.c.l.b16 %v2638
  %v2767 = vunpack.c.l.b16 %v2639
  %v2768 = vunpack.c.l.b16 %v2640
  %v2769 = vunpack.c.l.b16 %v2641
  %v2770 = vunpack.c.l.b16 %v2642
  %v2771 = vpack.c.b16 %v2708, %v2707
  %v2772 = vpack.c.b16 %v2710, %v2709
  %v2773 = vpack.c.b16 %v2712, %v2711
  %v2774 = vpack.c.b16 %v2714, %v2713
  %v2775 = vpack.c.b16 %v2716, %v2715
  %v2776 = vpack.c.b16 %v2718, %v2717
  %v2777 = vpack.c.b16 %v2720, %v2719
  %v2778 = vpack.c.b16 %v2722, %v2721
  %v2779 = vpack.c.b16 %v2724, %v2723
  %v2780 = vpack.c.b16 %v2726, %v2725
  %v2781 = vpack.c.b16 %v2728, %v2727
  %v2782 = vpack.c.b16 %v2730, %v2729
  %v2783 = vpack.c.b16 %v2732, %v2731
  %v2784 = vpack.c.b16 %v2734, %v2733
  %v2785 = vpack.c.b16 %v2736, %v2735
  %v2786 = vpack.c.b16 %v2738, %v2737
  %v2787 = vpack.c.b16 %v2740, %v2739
  %v2788 = vpack.c.b16 %v2742, %v2741
  %v2789 = vpack.c.b16 %v2744, %v2743
  %v2790 = vpack.c.b16 %v2746, %v2745
  %v2791 = vpack.c.b16 %v2748, %v2747
  %v2792 = vpack.c.b16 %v2750, %v2749
  %v2793 = vpack.c.b16 %v2752, %v2751
  %v2794 = vpack.c.b16 %v2754, %v2753
  %v2795 = vpack.c.b16 %v2756, %v2755
  %v2796 = vpack.c.b16 %v2758, %v2757
  %v2797 = vpack.c.b16 %v2760, %v2759
  %v2798 = vpack.c.b16 %v2762, %v2761
  %v2799 = vpack.c.b16 %v2764, %v2763
  %v2800 = vpack.c.b16 %v2766, %v2765
  %v2801 = vpack.c.b16 %v2768, %v2767
  %v2802 = vpack.c.b16 %v2770, %v2769
  %2835 = vmatprep.subr.bf16.mxu0 0
  %2836 = vmatpush1.bf16.msra.mxu0 %v2771
  %2837 = vmatprep.subr.bf16.mxu0 0
  %2838 = vmatpush1.bf16.msra.mxu0 %v2772
  %2839 = vmatprep.subr.bf16.mxu0 0
  %2840 = vmatpush1.bf16.msra.mxu0 %v2773
  %2841 = vmatprep.subr.bf16.mxu0 0
  %2842 = vmatpush1.bf16.msra.mxu0 %v2774
  %2843 = vmatprep.subr.bf16.mxu0 0
  %2844 = vmatpush1.bf16.msra.mxu0 %v2775
  %2845 = vmatprep.subr.bf16.mxu0 0
  %2846 = vmatpush1.bf16.msra.mxu0 %v2776
  %2847 = vmatprep.subr.bf16.mxu0 0
  %2848 = vmatpush1.bf16.msra.mxu0 %v2777
  %2849 = vmatprep.subr.bf16.mxu0 0
  %2850 = vmatpush1.bf16.msra.mxu0 %v2778
  %2851 = vmatprep.subr.bf16.mxu0 0
  %2852 = vmatpush1.bf16.msra.mxu0 %v2779
  %2853 = vmatprep.subr.bf16.mxu0 0
  %2854 = vmatpush1.bf16.msra.mxu0 %v2780
  %2855 = vmatprep.subr.bf16.mxu0 0
  %2856 = vmatpush1.bf16.msra.mxu0 %v2781
  %2857 = vmatprep.subr.bf16.mxu0 0
  %2858 = vmatpush1.bf16.msra.mxu0 %v2782
  %2859 = vmatprep.subr.bf16.mxu0 0
  %2860 = vmatpush1.bf16.msra.mxu0 %v2783
  %2861 = vmatprep.subr.bf16.mxu0 0
  %2862 = vmatpush1.bf16.msra.mxu0 %v2784
  %2863 = vmatprep.subr.bf16.mxu0 0
  %2864 = vmatpush1.bf16.msra.mxu0 %v2785
  %2865 = vmatprep.subr.bf16.mxu0 0
  %2866 = vmatpush1.bf16.msra.mxu0 %v2786
  %2867 = vmatprep.mubr.bf16.mxu0 %v217
  %2868 = vmatmul.mubr.bf16.gmra.mrb[0].mxu0 %v216
  %v2869 = vpop.f32.mrb[0].mxu0
  %v2870 = vadd.f32 0.0, %v2869
  %v2871 = vpop.f32.mrb[0].mxu0
  %v2872 = vpop.f32.mrb[0].mxu0
  %v2873 = vpop.f32.mrb[0].mxu0
  %2874 = vdwg.mxu0
  %2875 = vmatprep.subr.bf16.mxu0 0
  %2876 = vmatpush1.bf16.msra.mxu0 %v2787
  %2877 = vmatprep.subr.bf16.mxu0 0
  %2878 = vmatpush1.bf16.msra.mxu0 %v2788
  %2879 = vmatprep.subr.bf16.mxu0 0
  %2880 = vmatpush1.bf16.msra.mxu0 %v2789
  %2881 = vmatprep.subr.bf16.mxu0 0
  %2882 = vmatpush1.bf16.msra.mxu0 %v2790
  %2883 = vmatprep.subr.bf16.mxu0 0
  %2884 = vmatpush1.bf16.msra.mxu0 %v2791
  %2885 = vmatprep.subr.bf16.mxu0 0
  %2886 = vmatpush1.bf16.msra.mxu0 %v2792
  %2887 = vmatprep.subr.bf16.mxu0 0
  %2888 = vmatpush1.bf16.msra.mxu0 %v2793
  %2889 = vmatprep.subr.bf16.mxu0 0
  %2890 = vmatpush1.bf16.msra.mxu0 %v2794
  %2891 = vmatprep.subr.bf16.mxu0 0
  %2892 = vmatpush1.bf16.msra.mxu0 %v2795
  %2893 = vmatprep.subr.bf16.mxu0 0
  %2894 = vmatpush1.bf16.msra.mxu0 %v2796
  %2895 = vmatprep.subr.bf16.mxu0 0
  %2896 = vmatpush1.bf16.msra.mxu0 %v2797
  %2897 = vmatprep.subr.bf16.mxu0 0
  %2898 = vmatpush1.bf16.msra.mxu0 %v2798
  %2899 = vmatprep.subr.bf16.mxu0 0
  %2900 = vmatpush1.bf16.msra.mxu0 %v2799
  %2901 = vmatprep.subr.bf16.mxu0 0
  %2902 = vmatpush1.bf16.msra.mxu0 %v2800
  %2903 = vmatprep.subr.bf16.mxu0 0
  %2904 = vmatpush1.bf16.msra.mxu0 %v2801
  %2905 = vmatprep.subr.bf16.mxu0 0
  %2906 = vmatpush1.bf16.msra.mxu0 %v2802
  %2907 = vmatprep.mubr.bf16.mxu0 %v219
  %2908 = vmatmul.mubr.bf16.gmra.mrb[0].mxu0 %v218
  %v2909 = vpop.f32.mrb[0].mxu0
  %v2910 = vadd.f32 %v2870, %v2909
  %v2911 = vpop.f32.mrb[0].mxu0
  %v2912 = vpop.f32.mrb[0].mxu0
  %v2913 = vpop.f32.mrb[0].mxu0
  %2914 = vdwg.mxu0
  %s2915 = scalar_lea.vmem %s3, 2048
  %v2916 = vld [vmem:[%s2915] sm:$0xf]
  %v2917 = vld [vmem:[%s2915 + $0x4] sm:$0xf]
  %v2918 = vld [vmem:[%s2915 + $0x8] sm:$0xf]
  %v2919 = vld [vmem:[%s2915 + $0xc] sm:$0xf]
  %v2920 = vld [vmem:[%s2915 + $0x10] sm:$0xf]
  %v2921 = vld [vmem:[%s2915 + $0x14] sm:$0xf]
  %v2922 = vld [vmem:[%s2915 + $0x18] sm:$0xf]
  %v2923 = vld [vmem:[%s2915 + $0x1c] sm:$0xf]
  %v2924 = vld [vmem:[%s2915 + $0x20] sm:$0xf]
  %v2925 = vld [vmem:[%s2915 + $0x24] sm:$0xf]
  %v2926 = vld [vmem:[%s2915 + $0x28] sm:$0xf]
  %v2927 = vld [vmem:[%s2915 + $0x2c] sm:$0xf]
  %v2928 = vld [vmem:[%s2915 + $0x30] sm:$0xf]
  %v2929 = vld [vmem:[%s2915 + $0x34] sm:$0xf]
  %v2930 = vld [vmem:[%s2915 + $0x38] sm:$0xf]
  %v2931 = vld [vmem:[%s2915 + $0x3c] sm:$0xf]
  %v2932 = vld [vmem:[%s2915 + $0x40] sm:$0xf]
  %v2933 = vld [vmem:[%s2915 + $0x44] sm:$0xf]
  %v2934 = vld [vmem:[%s2915 + $0x48] sm:$0xf]
  %v2935 = vld [vmem:[%s2915 + $0x4c] sm:$0xf]
  %v2936 = vld [vmem:[%s2915 + $0x50] sm:$0xf]
  %v2937 = vld [vmem:[%s2915 + $0x54] sm:$0xf]
  %v2938 = vld [vmem:[%s2915 + $0x58] sm:$0xf]
  %v2939 = vld [vmem:[%s2915 + $0x5c] sm:$0xf]
  %v2940 = vld [vmem:[%s2915 + $0x60] sm:$0xf]
  %v2941 = vld [vmem:[%s2915 + $0x64] sm:$0xf]
  %v2942 = vld [vmem:[%s2915 + $0x68] sm:$0xf]
  %v2943 = vld [vmem:[%s2915 + $0x6c] sm:$0xf]
  %v2944 = vld [vmem:[%s2915 + $0x70] sm:$0xf]
  %v2945 = vld [vmem:[%s2915 + $0x74] sm:$0xf]
  %v2946 = vld [vmem:[%s2915 + $0x78] sm:$0xf]
  %v2947 = vld [vmem:[%s2915 + $0x7c] sm:$0xf]
  %v2948 = vld [vmem:[%s2915 + $0x80] sm:$0xf]
  %v2949 = vld [vmem:[%s2915 + $0x84] sm:$0xf]
  %v2950 = vld [vmem:[%s2915 + $0x88] sm:$0xf]
  %v2951 = vld [vmem:[%s2915 + $0x8c] sm:$0xf]
  %v2952 = vld [vmem:[%s2915 + $0x90] sm:$0xf]
  %v2953 = vld [vmem:[%s2915 + $0x94] sm:$0xf]
  %v2954 = vld [vmem:[%s2915 + $0x98] sm:$0xf]
  %v2955 = vld [vmem:[%s2915 + $0x9c] sm:$0xf]
  %v2956 = vld [vmem:[%s2915 + $0xa0] sm:$0xf]
  %v2957 = vld [vmem:[%s2915 + $0xa4] sm:$0xf]
  %v2958 = vld [vmem:[%s2915 + $0xa8] sm:$0xf]
  %v2959 = vld [vmem:[%s2915 + $0xac] sm:$0xf]
  %v2960 = vld [vmem:[%s2915 + $0xb0] sm:$0xf]
  %v2961 = vld [vmem:[%s2915 + $0xb4] sm:$0xf]
  %v2962 = vld [vmem:[%s2915 + $0xb8] sm:$0xf]
  %v2963 = vld [vmem:[%s2915 + $0xbc] sm:$0xf]
  %v2964 = vld [vmem:[%s2915 + $0xc0] sm:$0xf]
  %v2965 = vld [vmem:[%s2915 + $0xc4] sm:$0xf]
  %v2966 = vld [vmem:[%s2915 + $0xc8] sm:$0xf]
  %v2967 = vld [vmem:[%s2915 + $0xcc] sm:$0xf]
  %v2968 = vld [vmem:[%s2915 + $0xd0] sm:$0xf]
  %v2969 = vld [vmem:[%s2915 + $0xd4] sm:$0xf]
  %v2970 = vld [vmem:[%s2915 + $0xd8] sm:$0xf]
  %v2971 = vld [vmem:[%s2915 + $0xdc] sm:$0xf]
  %v2972 = vld [vmem:[%s2915 + $0xe0] sm:$0xf]
  %v2973 = vld [vmem:[%s2915 + $0xe4] sm:$0xf]
  %v2974 = vld [vmem:[%s2915 + $0xe8] sm:$0xf]
  %v2975 = vld [vmem:[%s2915 + $0xec] sm:$0xf]
  %v2976 = vld [vmem:[%s2915 + $0xf0] sm:$0xf]
  %v2977 = vld [vmem:[%s2915 + $0xf4] sm:$0xf]
  %v2978 = vld [vmem:[%s2915 + $0xf8] sm:$0xf]
  %v2979 = vld [vmem:[%s2915 + $0xfc] sm:$0xf]
  %v3044 = vunpack.c.l.b16 %v2916
  %v3045 = vunpack.c.l.b16 %v2917
  %v3046 = vunpack.c.l.b16 %v2918
  %v3047 = vunpack.c.l.b16 %v2919
  %v3048 = vunpack.c.l.b16 %v2920
  %v3049 = vunpack.c.l.b16 %v2921
  %v3050 = vunpack.c.l.b16 %v2922
  %v3051 = vunpack.c.l.b16 %v2923
  %v3052 = vunpack.c.l.b16 %v2924
  %v3053 = vunpack.c.l.b16 %v2925
  %v3054 = vunpack.c.l.b16 %v2926
  %v3055 = vunpack.c.l.b16 %v2927
  %v3056 = vunpack.c.l.b16 %v2928
  %v3057 = vunpack.c.l.b16 %v2929
  %v3058 = vunpack.c.l.b16 %v2930
  %v3059 = vunpack.c.l.b16 %v2931
  %v3060 = vunpack.c.l.b16 %v2932
  %v3061 = vunpack.c.l.b16 %v2933
  %v3062 = vunpack.c.l.b16 %v2934
  %v3063 = vunpack.c.l.b16 %v2935
  %v3064 = vunpack.c.l.b16 %v2936
  %v3065 = vunpack.c.l.b16 %v2937
  %v3066 = vunpack.c.l.b16 %v2938
  %v3067 = vunpack.c.l.b16 %v2939
  %v3068 = vunpack.c.l.b16 %v2940
  %v3069 = vunpack.c.l.b16 %v2941
  %v3070 = vunpack.c.l.b16 %v2942
  %v3071 = vunpack.c.l.b16 %v2943
  %v3072 = vunpack.c.l.b16 %v2944
  %v3073 = vunpack.c.l.b16 %v2945
  %v3074 = vunpack.c.l.b16 %v2946
  %v3075 = vunpack.c.l.b16 %v2947
  %v3076 = vunpack.c.l.b16 %v2948
  %v3077 = vunpack.c.l.b16 %v2949
  %v3078 = vunpack.c.l.b16 %v2950
  %v3079 = vunpack.c.l.b16 %v2951
  %v3080 = vunpack.c.l.b16 %v2952
  %v3081 = vunpack.c.l.b16 %v2953
  %v3082 = vunpack.c.l.b16 %v2954
  %v3083 = vunpack.c.l.b16 %v2955
  %v3084 = vunpack.c.l.b16 %v2956
  %v3085 = vunpack.c.l.b16 %v2957
  %v3086 = vunpack.c.l.b16 %v2958
  %v3087 = vunpack.c.l.b16 %v2959
  %v3088 = vunpack.c.l.b16 %v2960
  %v3089 = vunpack.c.l.b16 %v2961
  %v3090 = vunpack.c.l.b16 %v2962
  %v3091 = vunpack.c.l.b16 %v2963
  %v3092 = vunpack.c.l.b16 %v2964
  %v3093 = vunpack.c.l.b16 %v2965
  %v3094 = vunpack.c.l.b16 %v2966
  %v3095 = vunpack.c.l.b16 %v2967
  %v3096 = vunpack.c.l.b16 %v2968
  %v3097 = vunpack.c.l.b16 %v2969
  %v3098 = vunpack.c.l.b16 %v2970
  %v3099 = vunpack.c.l.b16 %v2971
  %v3100 = vunpack.c.l.b16 %v2972
  %v3101 = vunpack.c.l.b16 %v2973
  %v3102 = vunpack.c.l.b16 %v2974
  %v3103 = vunpack.c.l.b16 %v2975
  %v3104 = vunpack.c.l.b16 %v2976
  %v3105 = vunpack.c.l.b16 %v2977
  %v3106 = vunpack.c.l.b16 %v2978
  %v3107 = vunpack.c.l.b16 %v2979
  %v3108 = vpack.c.b16 %v3045, %v3044
  %v3109 = vpack.c.b16 %v3047, %v3046
  %v3110 = vpack.c.b16 %v3049, %v3048
  %v3111 = vpack.c.b16 %v3051, %v3050
  %v3112 = vpack.c.b16 %v3053, %v3052
  %v3113 = vpack.c.b16 %v3055, %v3054
  %v3114 = vpack.c.b16 %v3057, %v3056
  %v3115 = vpack.c.b16 %v3059, %v3058
  %v3116 = vpack.c.b16 %v3061, %v3060
  %v3117 = vpack.c.b16 %v3063, %v3062
  %v3118 = vpack.c.b16 %v3065, %v3064
  %v3119 = vpack.c.b16 %v3067, %v3066
  %v3120 = vpack.c.b16 %v3069, %v3068
  %v3121 = vpack.c.b16 %v3071, %v3070
  %v3122 = vpack.c.b16 %v3073, %v3072
  %v3123 = vpack.c.b16 %v3075, %v3074
  %v3124 = vpack.c.b16 %v3077, %v3076
  %v3125 = vpack.c.b16 %v3079, %v3078
  %v3126 = vpack.c.b16 %v3081, %v3080
  %v3127 = vpack.c.b16 %v3083, %v3082
  %v3128 = vpack.c.b16 %v3085, %v3084
  %v3129 = vpack.c.b16 %v3087, %v3086
  %v3130 = vpack.c.b16 %v3089, %v3088
  %v3131 = vpack.c.b16 %v3091, %v3090
  %v3132 = vpack.c.b16 %v3093, %v3092
  %v3133 = vpack.c.b16 %v3095, %v3094
  %v3134 = vpack.c.b16 %v3097, %v3096
  %v3135 = vpack.c.b16 %v3099, %v3098
  %v3136 = vpack.c.b16 %v3101, %v3100
  %v3137 = vpack.c.b16 %v3103, %v3102
  %v3138 = vpack.c.b16 %v3105, %v3104
  %v3139 = vpack.c.b16 %v3107, %v3106
  %3172 = vmatprep.subr.bf16.mxu0 0
  %3173 = vmatpush1.bf16.msra.mxu0 %v3108
  %3174 = vmatprep.subr.bf16.mxu0 0
  %3175 = vmatpush1.bf16.msra.mxu0 %v3109
  %3176 = vmatprep.subr.bf16.mxu0 0
  %3177 = vmatpush1.bf16.msra.mxu0 %v3110
  %3178 = vmatprep.subr.bf16.mxu0 0
  %3179 = vmatpush1.bf16.msra.mxu0 %v3111
  %3180 = vmatprep.subr.bf16.mxu0 0
  %3181 = vmatpush1.bf16.msra.mxu0 %v3112
  %3182 = vmatprep.subr.bf16.mxu0 0
  %3183 = vmatpush1.bf16.msra.mxu0 %v3113
  %3184 = vmatprep.subr.bf16.mxu0 0
  %3185 = vmatpush1.bf16.msra.mxu0 %v3114
  %3186 = vmatprep.subr.bf16.mxu0 0
  %3187 = vmatpush1.bf16.msra.mxu0 %v3115
  %3188 = vmatprep.subr.bf16.mxu0 0
  %3189 = vmatpush1.bf16.msra.mxu0 %v3116
  %3190 = vmatprep.subr.bf16.mxu0 0
  %3191 = vmatpush1.bf16.msra.mxu0 %v3117
  %3192 = vmatprep.subr.bf16.mxu0 0
  %3193 = vmatpush1.bf16.msra.mxu0 %v3118
  %3194 = vmatprep.subr.bf16.mxu0 0
  %3195 = vmatpush1.bf16.msra.mxu0 %v3119
  %3196 = vmatprep.subr.bf16.mxu0 0
  %3197 = vmatpush1.bf16.msra.mxu0 %v3120
  %3198 = vmatprep.subr.bf16.mxu0 0
  %3199 = vmatpush1.bf16.msra.mxu0 %v3121
  %3200 = vmatprep.subr.bf16.mxu0 0
  %3201 = vmatpush1.bf16.msra.mxu0 %v3122
  %3202 = vmatprep.subr.bf16.mxu0 0
  %3203 = vmatpush1.bf16.msra.mxu0 %v3123
  %3204 = vmatprep.mubr.bf16.mxu0 %v217
  %3205 = vmatmul.mubr.bf16.gmra.mrb[0].mxu0 %v216
  %v3206 = vpop.f32.mrb[0].mxu0
  %v3207 = vadd.f32 0.0, %v3206
  %v3208 = vpop.f32.mrb[0].mxu0
  %v3209 = vpop.f32.mrb[0].mxu0
  %v3210 = vpop.f32.mrb[0].mxu0
  %3211 = vdwg.mxu0
  %3212 = vmatprep.subr.bf16.mxu0 0
  %3213 = vmatpush1.bf16.msra.mxu0 %v3124
  %3214 = vmatprep.subr.bf16.mxu0 0
  %3215 = vmatpush1.bf16.msra.mxu0 %v3125
  %3216 = vmatprep.subr.bf16.mxu0 0
  %3217 = vmatpush1.bf16.msra.mxu0 %v3126
  %3218 = vmatprep.subr.bf16.mxu0 0
  %3219 = vmatpush1.bf16.msra.mxu0 %v3127
  %3220 = vmatprep.subr.bf16.mxu0 0
  %3221 = vmatpush1.bf16.msra.mxu0 %v3128
  %3222 = vmatprep.subr.bf16.mxu0 0
  %3223 = vmatpush1.bf16.msra.mxu0 %v3129
  %3224 = vmatprep.subr.bf16.mxu0 0
  %3225 = vmatpush1.bf16.msra.mxu0 %v3130
  %3226 = vmatprep.subr.bf16.mxu0 0
  %3227 = vmatpush1.bf16.msra.mxu0 %v3131
  %3228 = vmatprep.subr.bf16.mxu0 0
  %3229 = vmatpush1.bf16.msra.mxu0 %v3132
  %3230 = vmatprep.subr.bf16.mxu0 0
  %3231 = vmatpush1.bf16.msra.mxu0 %v3133
  %3232 = vmatprep.subr.bf16.mxu0 0
  %3233 = vmatpush1.bf16.msra.mxu0 %v3134
  %3234 = vmatprep.subr.bf16.mxu0 0
  %3235 = vmatpush1.bf16.msra.mxu0 %v3135
  %3236 = vmatprep.subr.bf16.mxu0 0
  %3237 = vmatpush1.bf16.msra.mxu0 %v3136
  %3238 = vmatprep.subr.bf16.mxu0 0
  %3239 = vmatpush1.bf16.msra.mxu0 %v3137
  %3240 = vmatprep.subr.bf16.mxu0 0
  %3241 = vmatpush1.bf16.msra.mxu0 %v3138
  %3242 = vmatprep.subr.bf16.mxu0 0
  %3243 = vmatpush1.bf16.msra.mxu0 %v3139
  %3244 = vmatprep.mubr.bf16.mxu0 %v219
  %3245 = vmatmul.mubr.bf16.gmra.mrb[0].mxu0 %v218
  %v3246 = vpop.f32.mrb[0].mxu0
  %v3247 = vadd.f32 %v3207, %v3246
  %v3248 = vpop.f32.mrb[0].mxu0
  %v3249 = vpop.f32.mrb[0].mxu0
  %v3250 = vpop.f32.mrb[0].mxu0
  %3251 = vdwg.mxu0
  %v3252 = vld [vmem:[%s4] sm:$0xff]
  %v3253 = vld [vmem:[%s4 + $0x8] sm:$0xff]
  %v3254 = vld [vmem:[%s5] sm:$0xff]
  %v3255 = vld [vmem:[%s5 + $0x8] sm:$0xff]
  %3257 = vset.pattern.permute.xlu0 0
  %3258 = vperm.xlu0 %3257, %v3254
  %v3259 = vpop.permute.xlu0 %3258
  %3262 = vset.pattern.permute.xlu0 0
  %3263 = vperm.xlu0 %3262, %v3255
  %v3264 = vpop.permute.xlu0 %3263
  %vm3266 = vcmask 588800
  %v3268 = vsel %vm3266, %v3252, 0
  %v3271 = vsel %vm3266, %v3253, 0
  %3273 = vmatprep.subr.mxu0 0.0
  %3274 = vmatpush1.msra.mxu0 %v551
  %3275 = vmatprep.subr.mxu0 0.0
  %3276 = vmatpush1.msra.mxu0 %v888
  %3277 = vmatprep.subr.mxu0 0.0
  %3278 = vmatpush1.msra.mxu0 %v1225
  %3279 = vmatprep.subr.mxu0 0.0
  %3280 = vmatpush1.msra.mxu0 %v1562
  %3281 = vmatprep.subr.mxu0 0.0
  %3282 = vmatpush1.msra.mxu0 %v1899
  %3283 = vmatprep.subr.mxu0 0.0
  %3284 = vmatpush1.msra.mxu0 %v2236
  %3285 = vmatprep.subr.mxu0 0.0
  %3286 = vmatpush1.msra.mxu0 %v2573
  %3287 = vmatprep.subr.mxu0 0.0
  %3288 = vmatpush1.msra.mxu0 %v2910
  %3289 = vmatprep.subr.mxu0 0.0
  %3290 = vmatpush1.msra.mxu0 %v3247
  %3291 = vmatprep.subr.mxu0 0.0
  %3292 = vmatpush1.msra.mxu0 0.0
  %3293 = vmatprep.subr.mxu0 0.0
  %3294 = vmatpush1.msra.mxu0 0.0
  %3295 = vmatprep.subr.mxu0 0.0
  %3296 = vmatpush1.msra.mxu0 0.0
  %3297 = vmatprep.subr.mxu0 0.0
  %3298 = vmatpush1.msra.mxu0 0.0
  %3299 = vmatprep.subr.mxu0 0.0
  %3300 = vmatpush1.msra.mxu0 0.0
  %3301 = vmatprep.subr.mxu0 0.0
  %3302 = vmatpush1.msra.mxu0 0.0
  %3303 = vmatprep.subr.mxu0 0.0
  %3304 = vmatpush1.msra.mxu0 0.0
  %3305 = vmatprep.subr.mxu0 0.0
  %3306 = vmatpush1.msra.mxu0 0.0
  %3307 = vmatprep.subr.mxu0 0.0
  %3308 = vmatpush1.msra.mxu0 0.0
  %3309 = vmatprep.subr.mxu0 0.0
  %3310 = vmatpush1.msra.mxu0 0.0
  %3311 = vmatprep.subr.mxu0 0.0
  %3312 = vmatpush1.msra.mxu0 0.0
  %3313 = vmatprep.subr.mxu0 0.0
  %3314 = vmatpush1.msra.mxu0 0.0
  %3315 = vmatprep.subr.mxu0 0.0
  %3316 = vmatpush1.msra.mxu0 0.0
  %3317 = vmatprep.subr.mxu0 0.0
  %3318 = vmatpush1.msra.mxu0 0.0
  %3319 = vmatprep.subr.mxu0 0.0
  %3320 = vmatpush1.msra.mxu0 0.0
  %3321 = vmatprep.subr.mxu0 0.0
  %3322 = vmatpush1.msra.mxu0 0.0
  %3323 = vmatprep.subr.mxu0 0.0
  %3324 = vmatpush1.msra.mxu0 0.0
  %3325 = vmatprep.subr.mxu0 0.0
  %3326 = vmatpush1.msra.mxu0 0.0
  %3327 = vmatprep.subr.mxu0 0.0
  %3328 = vmatpush1.msra.mxu0 0.0
  %3329 = vmatprep.subr.mxu0 0.0
  %3330 = vmatpush1.msra.mxu0 0.0
  %3331 = vmatprep.subr.mxu0 0.0
  %3332 = vmatpush1.msra.mxu0 0.0
  %3333 = vmatprep.subr.mxu0 0.0
  %3334 = vmatpush1.msra.mxu0 0.0
  %3335 = vmatprep.subr.mxu0 0.0
  %3336 = vmatpush1.msra.mxu0 0.0
  %3337 = vmatprep.mubr.f32.mxu0 0.0
  %3338 = vmatmul.mubr.f32.gmra.mrb[0].mxu0 %v3268
  %v3339 = vpop.f32.mrb[0].mxu0
  %v3340 = vadd.f32 %v3259, %v3339
  %v3341 = vpop.f32.mrb[0].mxu0
  %3342 = vmatprep.mubr.f32.mxu0 0.0
  %3343 = vmatmul.mubr.f32.gmra.mrb[0].mxu0 %v3271
  %v3344 = vpop.f32.mrb[0].mxu0
  %v3345 = vadd.f32 %v3264, %v3344
  %v3346 = vpop.f32.mrb[0].mxu0
  %3347 = vdwg.mxu0
  %v3348 = vmax.f32 %v3340, 0.0
  %v3349 = vmax.f32 %v3345, 0.0
  %3350 = vst [vmem:[%s7] sm:$0xff] %v3348
  %3351 = vst [vmem:[%s7 + $0x8] sm:$0xff] %v3349
  // Predicated region
  $region26: #{_forward_impl.1} parent=0 // pred_check
    _
  $region27: #{_forward_impl.1} parent=0 // pred_check_branch
    %3353 = sbr.rel (0) target = $region29
  $region28: #{_forward_impl.1} parent=0 // pred_region
    _
  $region29: #{_forward_impl.1} parent=0 // pred_fallthru
    _
  // Predicated region
  $region30: #{_forward_impl.1} parent=0 // pred_check
    _
  $region31: #{_forward_impl.1} parent=0 // pred_check_branch
    %3355 = sbr.rel (0) target = $region33
  $region32: #{_forward_impl.1} parent=0 // pred_region
    _
  $region33: #{_forward_impl.1} parent=0 // pred_fallthru
    _
  // Predicated region
  $region34: #{_forward_impl.1} parent=0 // pred_check
    _
  $region35: #{_forward_impl.1} parent=0 // pred_check_branch
    %3357 = sbr.rel (0) target = $region37
  $region36: #{_forward_impl.1} parent=0 // pred_region
    _
  $region37: #{_forward_impl.1} parent=0 // pred_fallthru
    _
  // Predicated region
  $region38: #{_forward_impl.1} parent=0 // pred_check
    _
  $region39: #{_forward_impl.1} parent=0 // pred_check_branch
    %3359 = sbr.rel (0) target = $region41
  $region40: #{_forward_impl.1} parent=0 // pred_region
    _
  $region41: #{_forward_impl.1} parent=0 // pred_fallthru
    _

</llo_original>
